<compile_context>
chip_gen: v5e
topology: v5e:2x2
jax: 0.10.0
libtpu: 0.0.40
codegen_flags: <defaults>
</compile_context>

<pallas_src>
import functools

import jax
import jax.numpy as jnp
from jax.experimental import pallas as pl
from jax.experimental.pallas import tpu as pltpu


IN_FEATURES = 28 * 28     # 784
HIDDEN1 = 600
HIDDEN2 = 100
LANE = 128
SUBLANE = 8

H1_PAD = 640              # round_up(600, 128)
H2_PAD = 128              # round_up(100, 128)


def _round_up(x, m):
    return (x + m - 1) // m * m


# ---------------------------------------------------------------------------
# Fused kernel: (folded InputNorm +) fc1/relu + fc2/relu + fc3
# ---------------------------------------------------------------------------
def _fused_mlp_kernel(x_ref, b1_ref, w1_ref, w2_ref, w3_ref, o_ref):
    # x_ref:  (bt, 784)     one flattened batch tile
    # b1_ref: (1, 640)      folded InputNorm bias: beta_flat @ W1 (zero-padded)
    # w1_ref: (784, 640)    gamma * W1^T, zero-padded columns
    # w2_ref: (640, 128)    W2^T zero-padded rows+cols
    # w3_ref: (128, Np)     W3^T zero-padded rows, Np = 128-padded num_classes
    # o_ref:  (bt, Np)
    h1 = jnp.dot(x_ref[...], w1_ref[...], preferred_element_type=jnp.float32)
    h1 = jnp.maximum(h1 + b1_ref[...], 0.0)
    h2 = jnp.dot(h1, w2_ref[...], preferred_element_type=jnp.float32)
    h2 = jnp.maximum(h2, 0.0)
    o_ref[...] = jnp.dot(h2, w3_ref[...], preferred_element_type=jnp.float32)


# ---------------------------------------------------------------------------
# Wrapper
# ---------------------------------------------------------------------------
@functools.partial(jax.jit, static_argnames=("num_classes", "batch_tile"))
def mnist_fc_in_forward(fused, x, *, num_classes, batch_tile=512):
    b1 = fused["b1"]
    w1 = fused["w1"]
    w2 = fused["w2"]
    w3 = fused["w3"]
    n_pad = w3.shape[1]

    B = x.shape[0]
    x_flat = x.reshape(B, IN_FEATURES).astype(jnp.float32)   # == x.view(-1, 784)

    # Sublane-aligned batch tile.
    bt = min(_round_up(B, SUBLANE), batch_tile)
    # Megacore: when the batch is large enough, make sure the grid has >= 2
    # steps so the "parallel" axis can shard across both TensorCores (v7x).
    if B >= 2 * SUBLANE:
        bt = min(bt, _round_up((B + 1) // 2, SUBLANE))
    b_pad = _round_up(B, bt)
    if b_pad != B:
        x_flat = jnp.pad(x_flat, ((0, b_pad - B), (0, 0)))

    out = pl.pallas_call(
        _fused_mlp_kernel,
        out_shape=jax.ShapeDtypeStruct((b_pad, n_pad), jnp.float32),
        grid=(b_pad // bt,),
        in_specs=[
            pl.BlockSpec((bt, IN_FEATURES), lambda i: (i, 0)),        # x tile
            pl.BlockSpec((1, H1_PAD), lambda i: (0, 0)),              # folded bias
            pl.BlockSpec((IN_FEATURES, H1_PAD), lambda i: (0, 0)),    # w1 (resident)
            pl.BlockSpec((H1_PAD, H2_PAD), lambda i: (0, 0)),         # w2 (resident)
            pl.BlockSpec((H2_PAD, n_pad), lambda i: (0, 0)),          # w3 (resident)
        ],
        out_specs=pl.BlockSpec((bt, n_pad), lambda i: (i, 0)),
        compiler_params=pltpu.CompilerParams(
            dimension_semantics=("parallel",),
            # Raise v5e's 16 MiB scoped default; equals the v6e/v7x default, so
            # safe on every generation while leaving headroom for bt up to ~1024.
            vmem_limit_bytes=32 * 1024 * 1024,
        ),
    )(x_flat, b1, w1, w2, w3)

    return out[:B, :num_classes]


# ---------------------------------------------------------------------------
# Parameters
# ---------------------------------------------------------------------------
def init_raw_params(key, num_classes=10):
    """Module-shaped parameters (weights stored transposed: (fan_in, fan_out)).

    gamma/beta get deterministic non-trivial values (as if trained) so the
    InputNorm fold is actually exercised by the correctness check.
    """
    k1, k2, k3, kb = jax.random.split(key, 4)

    def linear_w(k, fan_in, fan_out):
        # PyTorch nn.Linear default init range.
        lim = 1.0 / jnp.sqrt(float(fan_in))
        return jax.random.uniform(k, (fan_in, fan_out), jnp.float32, -lim, lim)

    return {
        "gamma": jnp.full((1,), 1.3, jnp.float32),                    # InputNorm gamma
        "beta": 0.1 * jax.random.normal(kb, (1, 28, 28), jnp.float32),  # InputNorm beta
        "w1": linear_w(k1, IN_FEATURES, HIDDEN1),
        "w2": linear_w(k2, HIDDEN1, HIDDEN2),
        "w3": linear_w(k3, HIDDEN2, num_classes),
    }


def fuse_and_pad_params(raw, num_classes):
    """Fold InputNorm into fc1 and zero-pad all dims to lane multiples."""
    gamma = raw["gamma"].reshape(()).astype(jnp.float32)
    beta_flat = raw["beta"].reshape(1, IN_FEATURES).astype(jnp.float32)
    w1, w2, w3 = raw["w1"], raw["w2"], raw["w3"]

    hp = jax.lax.Precision.HIGHEST
    w1_fold = gamma * w1                                   # (784, 600)
    b1_fold = jnp.dot(beta_flat, w1, precision=hp)         # (1, 600)

    n_pad = _round_up(max(num_classes, 1), LANE)
    w1p = jnp.zeros((IN_FEATURES, H1_PAD), jnp.float32).at[:, :HIDDEN1].set(w1_fold)
    b1p = jnp.zeros((1, H1_PAD), jnp.float32).at[:, :HIDDEN1].set(b1_fold)
    w2p = jnp.zeros((H1_PAD, H2_PAD), jnp.float32).at[:HIDDEN1, :HIDDEN2].set(w2)
    w3p = jnp.zeros((H2_PAD, n_pad), jnp.float32).at[:HIDDEN2, :num_classes].set(w3)
    return {"b1": b1p, "w1": w1p, "w2": w2p, "w3": w3p}


# ---------------------------------------------------------------------------
# Pure-JAX reference (unfolded, exact module math) for a sanity check
# ---------------------------------------------------------------------------
def _reference_forward(raw, x, num_classes):
    gamma = raw["gamma"].reshape(())
    xn = gamma * x + raw["beta"]                           # InputNorm(1, 28)
    xf = xn.reshape(x.shape[0], IN_FEATURES)
    hp = jax.lax.Precision.HIGHEST
    h1 = jnp.maximum(jnp.dot(xf, raw["w1"], precision=hp), 0.0)
    h2 = jnp.maximum(jnp.dot(h1, raw["w2"], precision=hp), 0.0)
    return jnp.dot(h2, raw["w3"], precision=hp)


if __name__ == "__main__":
    num_classes = 10
    key = jax.random.PRNGKey(0)
    k_params, k_x = jax.random.split(key)

    raw = init_raw_params(k_params, num_classes=num_classes)
    fused = fuse_and_pad_params(raw, num_classes)

    # InputNorm beta is (1, 28, 28) and fc1 expects 28*28, so spatial must be 28.
    x = jax.random.normal(k_x, (2, 1, 28, 28), jnp.float32)

    logits = mnist_fc_in_forward(fused, x, num_classes=num_classes)
    logits = jax.block_until_ready(logits)

    expected = _reference_forward(raw, x.astype(jnp.float32), num_classes)

    assert logits.shape == (2, num_classes)
    assert bool(jnp.all(jnp.isfinite(logits)))
    assert bool(jnp.allclose(logits, expected, rtol=1e-2, atol=1e-2))
    print("KERNEL_OK")
</pallas_src>

<mosaic_0001>
module attributes {stable_mosaic.version = 11 : i64} {
  func.func @_fused_mlp_kernel(%arg0: i32, %arg1: memref<8x784xf32, #tpu.memory_space<vmem>>, %arg2: memref<1x640xf32, #tpu.memory_space<vmem>>, %arg3: memref<784x640xf32, #tpu.memory_space<vmem>>, %arg4: memref<640x128xf32, #tpu.memory_space<vmem>>, %arg5: memref<128x128xf32, #tpu.memory_space<vmem>>, %arg6: memref<8x128xf32, #tpu.memory_space<vmem>>) attributes {dimension_semantics = [#tpu.dimension_semantics<parallel>], iteration_bounds = array<i64: 1>, scalar_prefetch = 0 : i64, scratch_operands = 0 : i64, tpu.core_type = #tpu.core_type<tc>, window_params = [{transform_indices = @transform_0, window_bounds = array<i64: 8, 784>}, {pipeline_mode = #tpu.pipeline_mode<synchronous>, transform_indices = @transform_1, window_bounds = array<i64: 1, 640>}, {pipeline_mode = #tpu.pipeline_mode<synchronous>, transform_indices = @transform_2, window_bounds = array<i64: 784, 640>}, {pipeline_mode = #tpu.pipeline_mode<synchronous>, transform_indices = @transform_3, window_bounds = array<i64: 640, 128>}, {pipeline_mode = #tpu.pipeline_mode<synchronous>, transform_indices = @transform_4, window_bounds = array<i64: 128, 128>}, {transform_indices = @transform_5, window_bounds = array<i64: 8, 128>}]} {
    %c0 = arith.constant 0 : index
    %c0_0 = arith.constant 0 : index
    %0 = vector.load %arg1[%c0, %c0_0] : memref<8x784xf32, #tpu.memory_space<vmem>>, vector<8x784xf32>
    %c0_1 = arith.constant 0 : index
    %c0_2 = arith.constant 0 : index
    %1 = vector.load %arg3[%c0_1, %c0_2] : memref<784x640xf32, #tpu.memory_space<vmem>>, vector<784x640xf32>
    %cst = arith.constant dense<0.000000e+00> : vector<8x640xf32>
    %2 = tpu.matmul %0, %1, %cst {dimension_numbers = #tpu.dot_dimension_numbers<[1], [0], [0], [1], [0, 0, 1, 1], [], []>} : vector<8x784xf32>, vector<784x640xf32>, vector<8x640xf32> -> vector<8x640xf32>
    %c0_3 = arith.constant 0 : index
    %c0_4 = arith.constant 0 : index
    %3 = vector.load %arg2[%c0_3, %c0_4] : memref<1x640xf32, #tpu.memory_space<vmem>>, vector<1x640xf32>
    %4 = vector.broadcast %3 : vector<1x640xf32> to vector<8x640xf32>
    %5 = arith.addf %2, %4 : vector<8x640xf32>
    %cst_5 = arith.constant 0.000000e+00 : f32
    %6 = vector.broadcast %cst_5 : f32 to vector<8x640xf32>
    %7 = arith.maximumf %5, %6 : vector<8x640xf32>
    %c0_6 = arith.constant 0 : index
    %c0_7 = arith.constant 0 : index
    %8 = vector.load %arg4[%c0_6, %c0_7] : memref<640x128xf32, #tpu.memory_space<vmem>>, vector<640x128xf32>
    %cst_8 = arith.constant dense<0.000000e+00> : vector<8x128xf32>
    %9 = tpu.matmul %7, %8, %cst_8 {dimension_numbers = #tpu.dot_dimension_numbers<[1], [0], [0], [1], [0, 0, 1, 1], [], []>} : vector<8x640xf32>, vector<640x128xf32>, vector<8x128xf32> -> vector<8x128xf32>
    %cst_9 = arith.constant 0.000000e+00 : f32
    %10 = vector.broadcast %cst_9 : f32 to vector<8x128xf32>
    %11 = arith.maximumf %9, %10 : vector<8x128xf32>
    %c0_10 = arith.constant 0 : index
    %c0_11 = arith.constant 0 : index
    %12 = vector.load %arg5[%c0_10, %c0_11] : memref<128x128xf32, #tpu.memory_space<vmem>>, vector<128x128xf32>
    %cst_12 = arith.constant dense<0.000000e+00> : vector<8x128xf32>
    %13 = tpu.matmul %11, %12, %cst_12 {dimension_numbers = #tpu.dot_dimension_numbers<[1], [0], [0], [1], [0, 0, 1, 1], [], []>} : vector<8x128xf32>, vector<128x128xf32>, vector<8x128xf32> -> vector<8x128xf32>
    %c0_13 = arith.constant 0 : index
    %c0_14 = arith.constant 0 : index
    %14 = vector.load %arg6[%c0_13, %c0_14] : memref<8x128xf32, #tpu.memory_space<vmem>>, vector<8x128xf32>
    tpu.vector_store %arg6[%c0_13, %c0_14], %13 {strides = array<i32>} : memref<8x128xf32, #tpu.memory_space<vmem>>, vector<8x128xf32>,
    return
  }
  func.func @transform_0(%arg0: i32) -> (i32, i32) {
    %c0_i32 = arith.constant 0 : i32
    %c0_i32_0 = arith.constant 0 : i32
    return %arg0, %c0_i32 : i32, i32
  }
  func.func @transform_1(%arg0: i32) -> (i32, i32) {
    %c0_i32 = arith.constant 0 : i32
    %c0_i32_0 = arith.constant 0 : i32
    %c0_i32_1 = arith.constant 0 : i32
    return %c0_i32, %c0_i32_0 : i32, i32
  }
  func.func @transform_2(%arg0: i32) -> (i32, i32) {
    %c0_i32 = arith.constant 0 : i32
    %c0_i32_0 = arith.constant 0 : i32
    %c0_i32_1 = arith.constant 0 : i32
    return %c0_i32, %c0_i32_0 : i32, i32
  }
  func.func @transform_3(%arg0: i32) -> (i32, i32) {
    %c0_i32 = arith.constant 0 : i32
    %c0_i32_0 = arith.constant 0 : i32
    %c0_i32_1 = arith.constant 0 : i32
    return %c0_i32, %c0_i32_0 : i32, i32
  }
  func.func @transform_4(%arg0: i32) -> (i32, i32) {
    %c0_i32 = arith.constant 0 : i32
    %c0_i32_0 = arith.constant 0 : i32
    %c0_i32_1 = arith.constant 0 : i32
    return %c0_i32, %c0_i32_0 : i32, i32
  }
  func.func @transform_5(%arg0: i32) -> (i32, i32) {
    %c0_i32 = arith.constant 0 : i32
    %c0_i32_0 = arith.constant 0 : i32
    return %arg0, %c0_i32 : i32, i32
  }
}

</mosaic_0001>

<llo_original>
// kernel: mnist_fc_in_forward.1
$region0: #{mnist_fc_in_forward.1}
  #allocation0 [shape = 'u32[]', space=smem, size = 0x4, offset = 0x4, fixed_abs, tag = 'smem constant byte address 0x4 - core index']
  #allocation1 [shape = 'u32[72,128]{1,0:T(1,128)}', space=vmem, size = 0x9000, scoped, tag = 'internal scratch']
  %s0 = inlined_call_operand.vmem [shape: f32[8,784], index: 0, kind: input, shape index: {}]
  %s1 = inlined_call_operand.hbm [shape: f32[1,640], index: 1, kind: input, shape index: {}]
  %s2 = inlined_call_operand.hbm [shape: f32[784,640], index: 2, kind: input, shape index: {}]
  %s3 = inlined_call_operand.hbm [shape: f32[640,128], index: 3, kind: input, shape index: {}]
  %s4 = inlined_call_operand.hbm [shape: f32[128,128], index: 4, kind: input, shape index: {}]
  %s5 = inlined_call_operand.vmem [shape: f32[8,128], index: 5, kind: output, shape index: {}]
  %s6 = sld [smem:[#allocation0]]
  $region46: #{mnist_fc_in_forward.1} parent=0
    _
  %s8 = ssub.s32 1, %s6
  %s9 = scalar_select 0, %s8, %s6
  $region1: #{mnist_fc_in_forward.1} parent=0
    #allocation2 [shape = 'u8[2560]{0}', space=vmem, size = 0xc00, scoped, tag = 'input window, operand 1, single buffered']
    #allocation3 [shape = 's32[1]{0}', space=sflag, size = 0x4, scoped, tag = 'scoped memory for mnist_fc_in_forward.1']
    #allocation4 [shape = 'u8[2007040]{0}', space=vmem, size = 0x1ea000, scoped, tag = 'input window, operand 2, single buffered']
    #allocation5 [shape = 's32[1]{0}', space=sflag, size = 0x4, scoped, tag = 'scoped memory for mnist_fc_in_forward.1']
    #allocation6 [shape = 'u8[327680]{0}', space=vmem, size = 0x50000, scoped, tag = 'input window, operand 3, single buffered']
    #allocation7 [shape = 'u8[65536]{0}', space=vmem, size = 0x10000, scoped, tag = 'input window, operand 4, single buffered']
    #allocation8 [shape = 's32[1]{0}', space=sflag, size = 0x4, scoped, tag = 'scoped memory for mnist_fc_in_forward.1']
    %10 = vsyncpa [#allocation3], 0
    %11 = vsyncpa [#allocation5], 0
    %12 = vsyncpa [#allocation8], 0
    // Predicated region
    $region2: #{mnist_fc_in_forward.1} parent=1 // pred_check
      _
    $region3: #{mnist_fc_in_forward.1} parent=1 // pred_check_branch
      %14 = sbr.rel (0) target = $region5
    $region4: #{mnist_fc_in_forward.1} parent=1 // pred_region
      _
    $region5: #{mnist_fc_in_forward.1} parent=1 // pred_fallthru
      _
    // Predicated region
    $region6: #{mnist_fc_in_forward.1} parent=1 // pred_check
      _
    $region7: #{mnist_fc_in_forward.1} parent=1 // pred_check_branch
      %16 = sbr.rel (0) target = $region9
    $region8: #{mnist_fc_in_forward.1} parent=1 // pred_region
      %18 = vsyncadd [#allocation3], 0
      %s20 = sshll.u32 %s1, 4
      %s21 = int_to_ptr.hbm [resolvable:$true] %s20
      %s22 = sshll.u32 [#allocation2], 4
      %s23 = int_to_ptr.vmem [resolvable:$true] %s22
      %25 = dma.hbm_to_vmem [thread:$0]  %s21, 80, %s23, [#allocation3]
    $region9: #{mnist_fc_in_forward.1} parent=1 // pred_fallthru
      _
    // Predicated region
    $region10: #{mnist_fc_in_forward.1} parent=1 // pred_check
      _
    $region11: #{mnist_fc_in_forward.1} parent=1 // pred_check_branch
      %27 = sbr.rel (0) target = $region13
    $region12: #{mnist_fc_in_forward.1} parent=1 // pred_region
      %29 = vsyncadd [#allocation5], 0
      %s30 = sshll.u32 %s2, 4
      %s31 = int_to_ptr.hbm [resolvable:$true] %s30
      %s32 = sshll.u32 [#allocation4], 4
      %s33 = int_to_ptr.vmem [resolvable:$true] %s32
      %38 = dma.hbm_to_vmem [thread:$0]  %s31, 62720, %s33, [#allocation5], 640, 640, 40
    $region13: #{mnist_fc_in_forward.1} parent=1 // pred_fallthru
      _
    // Predicated region
    $region14: #{mnist_fc_in_forward.1} parent=1 // pred_check
      _
    $region15: #{mnist_fc_in_forward.1} parent=1 // pred_check_branch
      %40 = sbr.rel (0) target = $region17
    $region16: #{mnist_fc_in_forward.1} parent=1 // pred_region
      %42 = vsyncadd [#allocation5], 0
      %s43 = sshll.u32 %s3, 4
      %s44 = int_to_ptr.hbm [resolvable:$true] %s43
      %s45 = sshll.u32 [#allocation6], 4
      %s46 = int_to_ptr.vmem [resolvable:$true] %s45
      %51 = dma.hbm_to_vmem [thread:$0]  %s44, 10240, %s46, [#allocation5], 128, 128, 8
    $region17: #{mnist_fc_in_forward.1} parent=1 // pred_fallthru
      _
    // Predicated region
    $region18: #{mnist_fc_in_forward.1} parent=1 // pred_check
      _
    $region19: #{mnist_fc_in_forward.1} parent=1 // pred_check_branch
      %53 = sbr.rel (0) target = $region21
    $region20: #{mnist_fc_in_forward.1} parent=1 // pred_region
      %55 = vsyncadd [#allocation8], 0
      %s56 = sshll.u32 %s4, 4
      %s57 = int_to_ptr.hbm [resolvable:$true] %s56
      %s58 = sshll.u32 [#allocation7], 4
      %s59 = int_to_ptr.vmem [resolvable:$true] %s58
      %64 = dma.hbm_to_vmem [thread:$0]  %s57, 2048, %s59, [#allocation8], 128, 128, 8
    $region21: #{mnist_fc_in_forward.1} parent=1 // pred_fallthru
      _
    // Predicated region
    $region22: #{mnist_fc_in_forward.1} parent=1 // pred_check
      _
    $region23: #{mnist_fc_in_forward.1} parent=1 // pred_check_branch
      %66 = sbr.rel (0) target = $region25
    $region24: #{mnist_fc_in_forward.1} parent=1 // pred_region
      %68 = dma.done [#allocation3], 80
    $region25: #{mnist_fc_in_forward.1} parent=1 // pred_fallthru
      _
    // Predicated region
    $region26: #{mnist_fc_in_forward.1} parent=1 // pred_check
      _
    $region27: #{mnist_fc_in_forward.1} parent=1 // pred_check_branch
      %70 = sbr.rel (0) target = $region29
    $region28: #{mnist_fc_in_forward.1} parent=1 // pred_region
      %72 = dma.done [#allocation5], 62720
    $region29: #{mnist_fc_in_forward.1} parent=1 // pred_fallthru
      _
    // Predicated region
    $region30: #{mnist_fc_in_forward.1} parent=1 // pred_check
      _
    $region31: #{mnist_fc_in_forward.1} parent=1 // pred_check_branch
      %74 = sbr.rel (0) target = $region33
    $region32: #{mnist_fc_in_forward.1} parent=1 // pred_region
      %76 = dma.done [#allocation5], 10240
    $region33: #{mnist_fc_in_forward.1} parent=1 // pred_fallthru
      _
    // Predicated region
    $region34: #{mnist_fc_in_forward.1} parent=1 // pred_check
      _
    $region35: #{mnist_fc_in_forward.1} parent=1 // pred_check_branch
      %78 = sbr.rel (0) target = $region37
    $region36: #{mnist_fc_in_forward.1} parent=1 // pred_region
      %80 = dma.done [#allocation8], 2048
    $region37: #{mnist_fc_in_forward.1} parent=1 // pred_fallthru
      _
    %v81 = vld [vmem:[%s0] sm:$0xff]
    %v82 = vld [vmem:[%s0 + $0x8] sm:$0xff]
    %v83 = vld [vmem:[%s0 + $0x10] sm:$0xff]
    %v84 = vld [vmem:[%s0 + $0x18] sm:$0xff]
    %v85 = vld [vmem:[%s0 + $0x20] sm:$0xff]
    %v86 = vld [vmem:[%s0 + $0x28] sm:$0xff]
    %v87 = vld [vmem:[%s0 + $0x30] sm:$0xff]
    %v88 = vld [vmem:[#allocation4] sm:$0xff]
    %v89 = vld [vmem:[#allocation4 + $0x8] sm:$0xff]
    %v90 = vld [vmem:[#allocation4 + $0x10] sm:$0xff]
    %v91 = vld [vmem:[#allocation4 + $0x18] sm:$0xff]
    %v92 = vld [vmem:[#allocation4 + $0x20] sm:$0xff]
    %v93 = vld [vmem:[#allocation4 + $0x28] sm:$0xff]
    %v94 = vld [vmem:[#allocation4 + $0x30] sm:$0xff]
    %v95 = vld [vmem:[#allocation4 + $0x38] sm:$0xff]
    %v96 = vld [vmem:[#allocation4 + $0x40] sm:$0xff]
    %v97 = vld [vmem:[#allocation4 + $0x48] sm:$0xff]
    %v98 = vld [vmem:[#allocation4 + $0x50] sm:$0xff]
    %v99 = vld [vmem:[#allocation4 + $0x58] sm:$0xff]
    %v100 = vld [vmem:[#allocation4 + $0x60] sm:$0xff]
    %v101 = vld [vmem:[#allocation4 + $0x68] sm:$0xff]
    %v102 = vld [vmem:[#allocation4 + $0x70] sm:$0xff]
    %v103 = vld [vmem:[#allocation4 + $0x78] sm:$0xff]
    %v104 = vld [vmem:[#allocation4 + $0x80] sm:$0xff]
    %v105 = vld [vmem:[#allocation4 + $0x88] sm:$0xff]
    %v106 = vld [vmem:[#allocation4 + $0x90] sm:$0xff]
    %v107 = vld [vmem:[#allocation4 + $0x98] sm:$0xff]
    %v108 = vld [vmem:[#allocation4 + $0xa0] sm:$0xff]
    %v109 = vld [vmem:[#allocation4 + $0xa8] sm:$0xff]
    %v110 = vld [vmem:[#allocation4 + $0xb0] sm:$0xff]
    %v111 = vld [vmem:[#allocation4 + $0xb8] sm:$0xff]
    %v112 = vld [vmem:[#allocation4 + $0xc0] sm:$0xff]
    %v113 = vld [vmem:[#allocation4 + $0xc8] sm:$0xff]
    %v114 = vld [vmem:[#allocation4 + $0xd0] sm:$0xff]
    %v115 = vld [vmem:[#allocation4 + $0xd8] sm:$0xff]
    %v116 = vld [vmem:[#allocation4 + $0xe0] sm:$0xff]
    %v117 = vld [vmem:[#allocation4 + $0xe8] sm:$0xff]
    %v118 = vld [vmem:[#allocation4 + $0xf0] sm:$0xff]
    %v119 = vld [vmem:[#allocation4 + $0xf8] sm:$0xff]
    %v120 = vld [vmem:[#allocation4 + $0x100] sm:$0xff]
    %v121 = vld [vmem:[#allocation4 + $0x108] sm:$0xff]
    %v122 = vld [vmem:[#allocation4 + $0x110] sm:$0xff]
    %v123 = vld [vmem:[#allocation4 + $0x118] sm:$0xff]
    %v124 = vld [vmem:[#allocation4 + $0x120] sm:$0xff]
    %v125 = vld [vmem:[#allocation4 + $0x128] sm:$0xff]
    %v126 = vld [vmem:[#allocation4 + $0x130] sm:$0xff]
    %v127 = vld [vmem:[#allocation4 + $0x138] sm:$0xff]
    %v128 = vld [vmem:[#allocation4 + $0x140] sm:$0xff]
    %v129 = vld [vmem:[#allocation4 + $0x148] sm:$0xff]
    %v130 = vld [vmem:[#allocation4 + $0x150] sm:$0xff]
    %v131 = vld [vmem:[#allocation4 + $0x158] sm:$0xff]
    %v132 = vld [vmem:[#allocation4 + $0x160] sm:$0xff]
    %v133 = vld [vmem:[#allocation4 + $0x168] sm:$0xff]
    %v134 = vld [vmem:[#allocation4 + $0x170] sm:$0xff]
    %v135 = vld [vmem:[#allocation4 + $0x178] sm:$0xff]
    %v136 = vld [vmem:[#allocation4 + $0x180] sm:$0xff]
    %v137 = vld [vmem:[#allocation4 + $0x188] sm:$0xff]
    %v138 = vld [vmem:[#allocation4 + $0x190] sm:$0xff]
    %v139 = vld [vmem:[#allocation4 + $0x198] sm:$0xff]
    %v140 = vld [vmem:[#allocation4 + $0x1a0] sm:$0xff]
    %v141 = vld [vmem:[#allocation4 + $0x1a8] sm:$0xff]
    %v142 = vld [vmem:[#allocation4 + $0x1b0] sm:$0xff]
    %v143 = vld [vmem:[#allocation4 + $0x1b8] sm:$0xff]
    %v144 = vld [vmem:[#allocation4 + $0x1c0] sm:$0xff]
    %v145 = vld [vmem:[#allocation4 + $0x1c8] sm:$0xff]
    %v146 = vld [vmem:[#allocation4 + $0x1d0] sm:$0xff]
    %v147 = vld [vmem:[#allocation4 + $0x1d8] sm:$0xff]
    %v148 = vld [vmem:[#allocation4 + $0x1e0] sm:$0xff]
    %v149 = vld [vmem:[#allocation4 + $0x1e8] sm:$0xff]
    %v150 = vld [vmem:[#allocation4 + $0x1f0] sm:$0xff]
    %v151 = vld [vmem:[#allocation4 + $0x1f8] sm:$0xff]
    %v152 = vld [vmem:[#allocation4 + $0x200] sm:$0xff]
    %v153 = vld [vmem:[#allocation4 + $0x208] sm:$0xff]
    %v154 = vld [vmem:[#allocation4 + $0x210] sm:$0xff]
    %v155 = vld [vmem:[#allocation4 + $0x218] sm:$0xff]
    %v156 = vld [vmem:[#allocation4 + $0x220] sm:$0xff]
    %v157 = vld [vmem:[#allocation4 + $0x228] sm:$0xff]
    %v158 = vld [vmem:[#allocation4 + $0x230] sm:$0xff]
    %v159 = vld [vmem:[#allocation4 + $0x238] sm:$0xff]
    %v160 = vld [vmem:[#allocation4 + $0x240] sm:$0xff]
    %v161 = vld [vmem:[#allocation4 + $0x248] sm:$0xff]
    %v162 = vld [vmem:[#allocation4 + $0x250] sm:$0xff]
    %v163 = vld [vmem:[#allocation4 + $0x258] sm:$0xff]
    %v164 = vld [vmem:[#allocation4 + $0x260] sm:$0xff]
    %v165 = vld [vmem:[#allocation4 + $0x268] sm:$0xff]
    %v166 = vld [vmem:[#allocation4 + $0x270] sm:$0xff]
    %v167 = vld [vmem:[#allocation4 + $0x278] sm:$0xff]
    %v168 = vld [vmem:[#allocation4 + $0x280] sm:$0xff]
    %v169 = vld [vmem:[#allocation4 + $0x288] sm:$0xff]
    %v170 = vld [vmem:[#allocation4 + $0x290] sm:$0xff]
    %v171 = vld [vmem:[#allocation4 + $0x298] sm:$0xff]
    %v172 = vld [vmem:[#allocation4 + $0x2a0] sm:$0xff]
    %v173 = vld [vmem:[#allocation4 + $0x2a8] sm:$0xff]
    %v174 = vld [vmem:[#allocation4 + $0x2b0] sm:$0xff]
    %v175 = vld [vmem:[#allocation4 + $0x2b8] sm:$0xff]
    %v176 = vld [vmem:[#allocation4 + $0x2c0] sm:$0xff]
    %v177 = vld [vmem:[#allocation4 + $0x2c8] sm:$0xff]
    %v178 = vld [vmem:[#allocation4 + $0x2d0] sm:$0xff]
    %v179 = vld [vmem:[#allocation4 + $0x2d8] sm:$0xff]
    %v180 = vld [vmem:[#allocation4 + $0x2e0] sm:$0xff]
    %v181 = vld [vmem:[#allocation4 + $0x2e8] sm:$0xff]
    %v182 = vld [vmem:[#allocation4 + $0x2f0] sm:$0xff]
    %v183 = vld [vmem:[#allocation4 + $0x2f8] sm:$0xff]
    %v184 = vld [vmem:[#allocation4 + $0x300] sm:$0xff]
    %v185 = vld [vmem:[#allocation4 + $0x308] sm:$0xff]
    %v186 = vld [vmem:[#allocation4 + $0x310] sm:$0xff]
    %v187 = vld [vmem:[#allocation4 + $0x318] sm:$0xff]
    %v188 = vld [vmem:[#allocation4 + $0x320] sm:$0xff]
    %v189 = vld [vmem:[#allocation4 + $0x328] sm:$0xff]
    %v190 = vld [vmem:[#allocation4 + $0x330] sm:$0xff]
    %v191 = vld [vmem:[#allocation4 + $0x338] sm:$0xff]
    %v192 = vld [vmem:[#allocation4 + $0x340] sm:$0xff]
    %v193 = vld [vmem:[#allocation4 + $0x348] sm:$0xff]
    %v194 = vld [vmem:[#allocation4 + $0x350] sm:$0xff]
    %v195 = vld [vmem:[#allocation4 + $0x358] sm:$0xff]
    %v196 = vld [vmem:[#allocation4 + $0x360] sm:$0xff]
    %v197 = vld [vmem:[#allocation4 + $0x368] sm:$0xff]
    %v198 = vld [vmem:[#allocation4 + $0x370] sm:$0xff]
    %v199 = vld [vmem:[#allocation4 + $0x378] sm:$0xff]
    %v200 = vld [vmem:[#allocation4 + $0x380] sm:$0xff]
    %v201 = vld [vmem:[#allocation4 + $0x388] sm:$0xff]
    %v202 = vld [vmem:[#allocation4 + $0x390] sm:$0xff]
    %v203 = vld [vmem:[#allocation4 + $0x398] sm:$0xff]
    %v204 = vld [vmem:[#allocation4 + $0x3a0] sm:$0xff]
    %v205 = vld [vmem:[#allocation4 + $0x3a8] sm:$0xff]
    %v206 = vld [vmem:[#allocation4 + $0x3b0] sm:$0xff]
    %v207 = vld [vmem:[#allocation4 + $0x3b8] sm:$0xff]
    %v208 = vld [vmem:[#allocation4 + $0x3c0] sm:$0xff]
    %v209 = vld [vmem:[#allocation4 + $0x3c8] sm:$0xff]
    %v210 = vld [vmem:[#allocation4 + $0x3d0] sm:$0xff]
    %v211 = vld [vmem:[#allocation4 + $0x3d8] sm:$0xff]
    %v212 = vld [vmem:[#allocation4 + $0x3e0] sm:$0xff]
    %v213 = vld [vmem:[#allocation4 + $0x3e8] sm:$0xff]
    %v214 = vld [vmem:[#allocation4 + $0x3f0] sm:$0xff]
    %v215 = vld [vmem:[#allocation4 + $0x3f8] sm:$0xff]
    %v216 = vld [vmem:[#allocation4 + $0x400] sm:$0xff]
    %v217 = vld [vmem:[#allocation4 + $0x408] sm:$0xff]
    %v218 = vld [vmem:[#allocation4 + $0x410] sm:$0xff]
    %v219 = vld [vmem:[#allocation4 + $0x418] sm:$0xff]
    %v220 = vld [vmem:[#allocation4 + $0x420] sm:$0xff]
    %v221 = vld [vmem:[#allocation4 + $0x428] sm:$0xff]
    %v222 = vld [vmem:[#allocation4 + $0x430] sm:$0xff]
    %v223 = vld [vmem:[#allocation4 + $0x438] sm:$0xff]
    %v224 = vld [vmem:[#allocation4 + $0x440] sm:$0xff]
    %v225 = vld [vmem:[#allocation4 + $0x448] sm:$0xff]
    %v226 = vld [vmem:[#allocation4 + $0x450] sm:$0xff]
    %v227 = vld [vmem:[#allocation4 + $0x458] sm:$0xff]
    %v228 = vld [vmem:[#allocation4 + $0x460] sm:$0xff]
    %v229 = vld [vmem:[#allocation4 + $0x468] sm:$0xff]
    %v230 = vld [vmem:[#allocation4 + $0x470] sm:$0xff]
    %v231 = vld [vmem:[#allocation4 + $0x478] sm:$0xff]
    %v232 = vld [vmem:[#allocation4 + $0x480] sm:$0xff]
    %v233 = vld [vmem:[#allocation4 + $0x488] sm:$0xff]
    %v234 = vld [vmem:[#allocation4 + $0x490] sm:$0xff]
    %v235 = vld [vmem:[#allocation4 + $0x498] sm:$0xff]
    %v236 = vld [vmem:[#allocation4 + $0x4a0] sm:$0xff]
    %v237 = vld [vmem:[#allocation4 + $0x4a8] sm:$0xff]
    %v238 = vld [vmem:[#allocation4 + $0x4b0] sm:$0xff]
    %v239 = vld [vmem:[#allocation4 + $0x4b8] sm:$0xff]
    %v240 = vld [vmem:[#allocation4 + $0x4c0] sm:$0xff]
    %v241 = vld [vmem:[#allocation4 + $0x4c8] sm:$0xff]
    %v242 = vld [vmem:[#allocation4 + $0x4d0] sm:$0xff]
    %v243 = vld [vmem:[#allocation4 + $0x4d8] sm:$0xff]
    %v244 = vld [vmem:[#allocation4 + $0x4e0] sm:$0xff]
    %v245 = vld [vmem:[#allocation4 + $0x4e8] sm:$0xff]
    %v246 = vld [vmem:[#allocation4 + $0x4f0] sm:$0xff]
    %v247 = vld [vmem:[#allocation4 + $0x4f8] sm:$0xff]
    %v248 = vld [vmem:[#allocation4 + $0x500] sm:$0xff]
    %v249 = vld [vmem:[#allocation4 + $0x508] sm:$0xff]
    %v250 = vld [vmem:[#allocation4 + $0x510] sm:$0xff]
    %v251 = vld [vmem:[#allocation4 + $0x518] sm:$0xff]
    %v252 = vld [vmem:[#allocation4 + $0x520] sm:$0xff]
    %v253 = vld [vmem:[#allocation4 + $0x528] sm:$0xff]
    %v254 = vld [vmem:[#allocation4 + $0x530] sm:$0xff]
    %v255 = vld [vmem:[#allocation4 + $0x538] sm:$0xff]
    %v256 = vld [vmem:[#allocation4 + $0x540] sm:$0xff]
    %v257 = vld [vmem:[#allocation4 + $0x548] sm:$0xff]
    %v258 = vld [vmem:[#allocation4 + $0x550] sm:$0xff]
    %v259 = vld [vmem:[#allocation4 + $0x558] sm:$0xff]
    %v260 = vld [vmem:[#allocation4 + $0x560] sm:$0xff]
    %v261 = vld [vmem:[#allocation4 + $0x568] sm:$0xff]
    %v262 = vld [vmem:[#allocation4 + $0x570] sm:$0xff]
    %v263 = vld [vmem:[#allocation4 + $0x578] sm:$0xff]
    %v264 = vld [vmem:[#allocation4 + $0x580] sm:$0xff]
    %v265 = vld [vmem:[#allocation4 + $0x588] sm:$0xff]
    %v266 = vld [vmem:[#allocation4 + $0x590] sm:$0xff]
    %v267 = vld [vmem:[#allocation4 + $0x598] sm:$0xff]
    %v268 = vld [vmem:[#allocation4 + $0x5a0] sm:$0xff]
    %v269 = vld [vmem:[#allocation4 + $0x5a8] sm:$0xff]
    %v270 = vld [vmem:[#allocation4 + $0x5b0] sm:$0xff]
    %v271 = vld [vmem:[#allocation4 + $0x5b8] sm:$0xff]
    %v272 = vld [vmem:[#allocation4 + $0x5c0] sm:$0xff]
    %v273 = vld [vmem:[#allocation4 + $0x5c8] sm:$0xff]
    %v274 = vld [vmem:[#allocation4 + $0x5d0] sm:$0xff]
    %v275 = vld [vmem:[#allocation4 + $0x5d8] sm:$0xff]
    %v276 = vld [vmem:[#allocation4 + $0x5e0] sm:$0xff]
    %v277 = vld [vmem:[#allocation4 + $0x5e8] sm:$0xff]
    %v278 = vld [vmem:[#allocation4 + $0x5f0] sm:$0xff]
    %v279 = vld [vmem:[#allocation4 + $0x5f8] sm:$0xff]
    %v280 = vld [vmem:[#allocation4 + $0x600] sm:$0xff]
    %v281 = vld [vmem:[#allocation4 + $0x608] sm:$0xff]
    %v282 = vld [vmem:[#allocation4 + $0x610] sm:$0xff]
    %v283 = vld [vmem:[#allocation4 + $0x618] sm:$0xff]
    %v284 = vld [vmem:[#allocation4 + $0x620] sm:$0xff]
    %v285 = vld [vmem:[#allocation4 + $0x628] sm:$0xff]
    %v286 = vld [vmem:[#allocation4 + $0x630] sm:$0xff]
    %v287 = vld [vmem:[#allocation4 + $0x638] sm:$0xff]
    %v288 = vld [vmem:[#allocation4 + $0x640] sm:$0xff]
    %v289 = vld [vmem:[#allocation4 + $0x648] sm:$0xff]
    %v290 = vld [vmem:[#allocation4 + $0x650] sm:$0xff]
    %v291 = vld [vmem:[#allocation4 + $0x658] sm:$0xff]
    %v292 = vld [vmem:[#allocation4 + $0x660] sm:$0xff]
    %v293 = vld [vmem:[#allocation4 + $0x668] sm:$0xff]
    %v294 = vld [vmem:[#allocation4 + $0x670] sm:$0xff]
    %v295 = vld [vmem:[#allocation4 + $0x678] sm:$0xff]
    %v296 = vld [vmem:[#allocation4 + $0x680] sm:$0xff]
    %v297 = vld [vmem:[#allocation4 + $0x688] sm:$0xff]
    %v298 = vld [vmem:[#allocation4 + $0x690] sm:$0xff]
    %v299 = vld [vmem:[#allocation4 + $0x698] sm:$0xff]
    %v300 = vld [vmem:[#allocation4 + $0x6a0] sm:$0xff]
    %v301 = vld [vmem:[#allocation4 + $0x6a8] sm:$0xff]
    %v302 = vld [vmem:[#allocation4 + $0x6b0] sm:$0xff]
    %v303 = vld [vmem:[#allocation4 + $0x6b8] sm:$0xff]
    %v304 = vld [vmem:[#allocation4 + $0x6c0] sm:$0xff]
    %v305 = vld [vmem:[#allocation4 + $0x6c8] sm:$0xff]
    %v306 = vld [vmem:[#allocation4 + $0x6d0] sm:$0xff]
    %v307 = vld [vmem:[#allocation4 + $0x6d8] sm:$0xff]
    %v308 = vld [vmem:[#allocation4 + $0x6e0] sm:$0xff]
    %v309 = vld [vmem:[#allocation4 + $0x6e8] sm:$0xff]
    %v310 = vld [vmem:[#allocation4 + $0x6f0] sm:$0xff]
    %v311 = vld [vmem:[#allocation4 + $0x6f8] sm:$0xff]
    %v312 = vld [vmem:[#allocation4 + $0x700] sm:$0xff]
    %v313 = vld [vmem:[#allocation4 + $0x708] sm:$0xff]
    %v314 = vld [vmem:[#allocation4 + $0x710] sm:$0xff]
    %v315 = vld [vmem:[#allocation4 + $0x718] sm:$0xff]
    %v316 = vld [vmem:[#allocation4 + $0x720] sm:$0xff]
    %v317 = vld [vmem:[#allocation4 + $0x728] sm:$0xff]
    %v318 = vld [vmem:[#allocation4 + $0x730] sm:$0xff]
    %v319 = vld [vmem:[#allocation4 + $0x738] sm:$0xff]
    %v320 = vld [vmem:[#allocation4 + $0x740] sm:$0xff]
    %v321 = vld [vmem:[#allocation4 + $0x748] sm:$0xff]
    %v322 = vld [vmem:[#allocation4 + $0x750] sm:$0xff]
    %v323 = vld [vmem:[#allocation4 + $0x758] sm:$0xff]
    %v324 = vld [vmem:[#allocation4 + $0x760] sm:$0xff]
    %v325 = vld [vmem:[#allocation4 + $0x768] sm:$0xff]
    %v326 = vld [vmem:[#allocation4 + $0x770] sm:$0xff]
    %v327 = vld [vmem:[#allocation4 + $0x778] sm:$0xff]
    %v328 = vld [vmem:[#allocation4 + $0x780] sm:$0xff]
    %v329 = vld [vmem:[#allocation4 + $0x788] sm:$0xff]
    %v330 = vld [vmem:[#allocation4 + $0x790] sm:$0xff]
    %v331 = vld [vmem:[#allocation4 + $0x798] sm:$0xff]
    %v332 = vld [vmem:[#allocation4 + $0x7a0] sm:$0xff]
    %v333 = vld [vmem:[#allocation4 + $0x7a8] sm:$0xff]
    %v334 = vld [vmem:[#allocation4 + $0x7b0] sm:$0xff]
    %v335 = vld [vmem:[#allocation4 + $0x7b8] sm:$0xff]
    %v336 = vld [vmem:[#allocation4 + $0x7c0] sm:$0xff]
    %v337 = vld [vmem:[#allocation4 + $0x7c8] sm:$0xff]
    %v338 = vld [vmem:[#allocation4 + $0x7d0] sm:$0xff]
    %v339 = vld [vmem:[#allocation4 + $0x7d8] sm:$0xff]
    %v340 = vld [vmem:[#allocation4 + $0x7e0] sm:$0xff]
    %v341 = vld [vmem:[#allocation4 + $0x7e8] sm:$0xff]
    %v342 = vld [vmem:[#allocation4 + $0x7f0] sm:$0xff]
    %v343 = vld [vmem:[#allocation4 + $0x7f8] sm:$0xff]
    %v344 = vld [vmem:[#allocation4 + $0x800] sm:$0xff]
    %v345 = vld [vmem:[#allocation4 + $0x808] sm:$0xff]
    %v346 = vld [vmem:[#allocation4 + $0x810] sm:$0xff]
    %v347 = vld [vmem:[#allocation4 + $0x818] sm:$0xff]
    %v348 = vld [vmem:[#allocation4 + $0x820] sm:$0xff]
    %v349 = vld [vmem:[#allocation4 + $0x828] sm:$0xff]
    %v350 = vld [vmem:[#allocation4 + $0x830] sm:$0xff]
    %v351 = vld [vmem:[#allocation4 + $0x838] sm:$0xff]
    %v352 = vld [vmem:[#allocation4 + $0x840] sm:$0xff]
    %v353 = vld [vmem:[#allocation4 + $0x848] sm:$0xff]
    %v354 = vld [vmem:[#allocation4 + $0x850] sm:$0xff]
    %v355 = vld [vmem:[#allocation4 + $0x858] sm:$0xff]
    %v356 = vld [vmem:[#allocation4 + $0x860] sm:$0xff]
    %v357 = vld [vmem:[#allocation4 + $0x868] sm:$0xff]
    %v358 = vld [vmem:[#allocation4 + $0x870] sm:$0xff]
    %v359 = vld [vmem:[#allocation4 + $0x878] sm:$0xff]
    %v360 = vld [vmem:[#allocation4 + $0x880] sm:$0xff]
    %v361 = vld [vmem:[#allocation4 + $0x888] sm:$0xff]
    %v362 = vld [vmem:[#allocation4 + $0x890] sm:$0xff]
    %v363 = vld [vmem:[#allocation4 + $0x898] sm:$0xff]
    %v364 = vld [vmem:[#allocation4 + $0x8a0] sm:$0xff]
    %v365 = vld [vmem:[#allocation4 + $0x8a8] sm:$0xff]
    %v366 = vld [vmem:[#allocation4 + $0x8b0] sm:$0xff]
    %v367 = vld [vmem:[#allocation4 + $0x8b8] sm:$0xff]
    %v368 = vld [vmem:[#allocation4 + $0x8c0] sm:$0xff]
    %v369 = vld [vmem:[#allocation4 + $0x8c8] sm:$0xff]
    %v370 = vld [vmem:[#allocation4 + $0x8d0] sm:$0xff]
    %v371 = vld [vmem:[#allocation4 + $0x8d8] sm:$0xff]
    %v372 = vld [vmem:[#allocation4 + $0x8e0] sm:$0xff]
    %v373 = vld [vmem:[#allocation4 + $0x8e8] sm:$0xff]
    %v374 = vld [vmem:[#allocation4 + $0x8f0] sm:$0xff]
    %v375 = vld [vmem:[#allocation4 + $0x8f8] sm:$0xff]
    %v376 = vld [vmem:[#allocation4 + $0x900] sm:$0xff]
    %v377 = vld [vmem:[#allocation4 + $0x908] sm:$0xff]
    %v378 = vld [vmem:[#allocation4 + $0x910] sm:$0xff]
    %v379 = vld [vmem:[#allocation4 + $0x918] sm:$0xff]
    %v380 = vld [vmem:[#allocation4 + $0x920] sm:$0xff]
    %v381 = vld [vmem:[#allocation4 + $0x928] sm:$0xff]
    %v382 = vld [vmem:[#allocation4 + $0x930] sm:$0xff]
    %v383 = vld [vmem:[#allocation4 + $0x938] sm:$0xff]
    %v384 = vld [vmem:[#allocation4 + $0x940] sm:$0xff]
    %v385 = vld [vmem:[#allocation4 + $0x948] sm:$0xff]
    %v386 = vld [vmem:[#allocation4 + $0x950] sm:$0xff]
    %v387 = vld [vmem:[#allocation4 + $0x958] sm:$0xff]
    %v388 = vld [vmem:[#allocation4 + $0x960] sm:$0xff]
    %v389 = vld [vmem:[#allocation4 + $0x968] sm:$0xff]
    %v390 = vld [vmem:[#allocation4 + $0x970] sm:$0xff]
    %v391 = vld [vmem:[#allocation4 + $0x978] sm:$0xff]
    %v392 = vld [vmem:[#allocation4 + $0x980] sm:$0xff]
    %v393 = vld [vmem:[#allocation4 + $0x988] sm:$0xff]
    %v394 = vld [vmem:[#allocation4 + $0x990] sm:$0xff]
    %v395 = vld [vmem:[#allocation4 + $0x998] sm:$0xff]
    %v396 = vld [vmem:[#allocation4 + $0x9a0] sm:$0xff]
    %v397 = vld [vmem:[#allocation4 + $0x9a8] sm:$0xff]
    %v398 = vld [vmem:[#allocation4 + $0x9b0] sm:$0xff]
    %v399 = vld [vmem:[#allocation4 + $0x9b8] sm:$0xff]
    %v400 = vld [vmem:[#allocation4 + $0x9c0] sm:$0xff]
    %v401 = vld [vmem:[#allocation4 + $0x9c8] sm:$0xff]
    %v402 = vld [vmem:[#allocation4 + $0x9d0] sm:$0xff]
    %v403 = vld [vmem:[#allocation4 + $0x9d8] sm:$0xff]
    %v404 = vld [vmem:[#allocation4 + $0x9e0] sm:$0xff]
    %v405 = vld [vmem:[#allocation4 + $0x9e8] sm:$0xff]
    %v406 = vld [vmem:[#allocation4 + $0x9f0] sm:$0xff]
    %v407 = vld [vmem:[#allocation4 + $0x9f8] sm:$0xff]
    %v408 = vld [vmem:[#allocation4 + $0xa00] sm:$0xff]
    %v409 = vld [vmem:[#allocation4 + $0xa08] sm:$0xff]
    %v410 = vld [vmem:[#allocation4 + $0xa10] sm:$0xff]
    %v411 = vld [vmem:[#allocation4 + $0xa18] sm:$0xff]
    %v412 = vld [vmem:[#allocation4 + $0xa20] sm:$0xff]
    %v413 = vld [vmem:[#allocation4 + $0xa28] sm:$0xff]
    %v414 = vld [vmem:[#allocation4 + $0xa30] sm:$0xff]
    %v415 = vld [vmem:[#allocation4 + $0xa38] sm:$0xff]
    %v416 = vld [vmem:[#allocation4 + $0xa40] sm:$0xff]
    %v417 = vld [vmem:[#allocation4 + $0xa48] sm:$0xff]
    %v418 = vld [vmem:[#allocation4 + $0xa50] sm:$0xff]
    %v419 = vld [vmem:[#allocation4 + $0xa58] sm:$0xff]
    %v420 = vld [vmem:[#allocation4 + $0xa60] sm:$0xff]
    %v421 = vld [vmem:[#allocation4 + $0xa68] sm:$0xff]
    %v422 = vld [vmem:[#allocation4 + $0xa70] sm:$0xff]
    %v423 = vld [vmem:[#allocation4 + $0xa78] sm:$0xff]
    %v424 = vld [vmem:[#allocation4 + $0xa80] sm:$0xff]
    %v425 = vld [vmem:[#allocation4 + $0xa88] sm:$0xff]
    %v426 = vld [vmem:[#allocation4 + $0xa90] sm:$0xff]
    %v427 = vld [vmem:[#allocation4 + $0xa98] sm:$0xff]
    %v428 = vld [vmem:[#allocation4 + $0xaa0] sm:$0xff]
    %v429 = vld [vmem:[#allocation4 + $0xaa8] sm:$0xff]
    %v430 = vld [vmem:[#allocation4 + $0xab0] sm:$0xff]
    %v431 = vld [vmem:[#allocation4 + $0xab8] sm:$0xff]
    %v432 = vld [vmem:[#allocation4 + $0xac0] sm:$0xff]
    %v433 = vld [vmem:[#allocation4 + $0xac8] sm:$0xff]
    %v434 = vld [vmem:[#allocation4 + $0xad0] sm:$0xff]
    %v435 = vld [vmem:[#allocation4 + $0xad8] sm:$0xff]
    %v436 = vld [vmem:[#allocation4 + $0xae0] sm:$0xff]
    %v437 = vld [vmem:[#allocation4 + $0xae8] sm:$0xff]
    %v438 = vld [vmem:[#allocation4 + $0xaf0] sm:$0xff]
    %v439 = vld [vmem:[#allocation4 + $0xaf8] sm:$0xff]
    %v440 = vld [vmem:[#allocation4 + $0xb00] sm:$0xff]
    %v441 = vld [vmem:[#allocation4 + $0xb08] sm:$0xff]
    %v442 = vld [vmem:[#allocation4 + $0xb10] sm:$0xff]
    %v443 = vld [vmem:[#allocation4 + $0xb18] sm:$0xff]
    %v444 = vld [vmem:[#allocation4 + $0xb20] sm:$0xff]
    %v445 = vld [vmem:[#allocation4 + $0xb28] sm:$0xff]
    %v446 = vld [vmem:[#allocation4 + $0xb30] sm:$0xff]
    %v447 = vld [vmem:[#allocation4 + $0xb38] sm:$0xff]
    %v448 = vld [vmem:[#allocation4 + $0xb40] sm:$0xff]
    %v449 = vld [vmem:[#allocation4 + $0xb48] sm:$0xff]
    %v450 = vld [vmem:[#allocation4 + $0xb50] sm:$0xff]
    %v451 = vld [vmem:[#allocation4 + $0xb58] sm:$0xff]
    %v452 = vld [vmem:[#allocation4 + $0xb60] sm:$0xff]
    %v453 = vld [vmem:[#allocation4 + $0xb68] sm:$0xff]
    %v454 = vld [vmem:[#allocation4 + $0xb70] sm:$0xff]
    %v455 = vld [vmem:[#allocation4 + $0xb78] sm:$0xff]
    %v456 = vld [vmem:[#allocation4 + $0xb80] sm:$0xff]
    %v457 = vld [vmem:[#allocation4 + $0xb88] sm:$0xff]
    %v458 = vld [vmem:[#allocation4 + $0xb90] sm:$0xff]
    %v459 = vld [vmem:[#allocation4 + $0xb98] sm:$0xff]
    %v460 = vld [vmem:[#allocation4 + $0xba0] sm:$0xff]
    %v461 = vld [vmem:[#allocation4 + $0xba8] sm:$0xff]
    %v462 = vld [vmem:[#allocation4 + $0xbb0] sm:$0xff]
    %v463 = vld [vmem:[#allocation4 + $0xbb8] sm:$0xff]
    %v464 = vld [vmem:[#allocation4 + $0xbc0] sm:$0xff]
    %v465 = vld [vmem:[#allocation4 + $0xbc8] sm:$0xff]
    %v466 = vld [vmem:[#allocation4 + $0xbd0] sm:$0xff]
    %v467 = vld [vmem:[#allocation4 + $0xbd8] sm:$0xff]
    %v468 = vld [vmem:[#allocation4 + $0xbe0] sm:$0xff]
    %v469 = vld [vmem:[#allocation4 + $0xbe8] sm:$0xff]
    %v470 = vld [vmem:[#allocation4 + $0xbf0] sm:$0xff]
    %v471 = vld [vmem:[#allocation4 + $0xbf8] sm:$0xff]
    %v472 = vld [vmem:[#allocation4 + $0xc00] sm:$0xff]
    %v473 = vld [vmem:[#allocation4 + $0xc08] sm:$0xff]
    %v474 = vld [vmem:[#allocation4 + $0xc10] sm:$0xff]
    %v475 = vld [vmem:[#allocation4 + $0xc18] sm:$0xff]
    %v476 = vld [vmem:[#allocation4 + $0xc20] sm:$0xff]
    %v477 = vld [vmem:[#allocation4 + $0xc28] sm:$0xff]
    %v478 = vld [vmem:[#allocation4 + $0xc30] sm:$0xff]
    %v479 = vld [vmem:[#allocation4 + $0xc38] sm:$0xff]
    %v480 = vld [vmem:[#allocation4 + $0xc40] sm:$0xff]
    %v481 = vld [vmem:[#allocation4 + $0xc48] sm:$0xff]
    %v482 = vld [vmem:[#allocation4 + $0xc50] sm:$0xff]
    %v483 = vld [vmem:[#allocation4 + $0xc58] sm:$0xff]
    %v484 = vld [vmem:[#allocation4 + $0xc60] sm:$0xff]
    %v485 = vld [vmem:[#allocation4 + $0xc68] sm:$0xff]
    %v486 = vld [vmem:[#allocation4 + $0xc70] sm:$0xff]
    %v487 = vld [vmem:[#allocation4 + $0xc78] sm:$0xff]
    %v488 = vld [vmem:[#allocation4 + $0xc80] sm:$0xff]
    %v489 = vld [vmem:[#allocation4 + $0xc88] sm:$0xff]
    %v490 = vld [vmem:[#allocation4 + $0xc90] sm:$0xff]
    %v491 = vld [vmem:[#allocation4 + $0xc98] sm:$0xff]
    %v492 = vld [vmem:[#allocation4 + $0xca0] sm:$0xff]
    %v493 = vld [vmem:[#allocation4 + $0xca8] sm:$0xff]
    %v494 = vld [vmem:[#allocation4 + $0xcb0] sm:$0xff]
    %v495 = vld [vmem:[#allocation4 + $0xcb8] sm:$0xff]
    %v496 = vld [vmem:[#allocation4 + $0xcc0] sm:$0xff]
    %v497 = vld [vmem:[#allocation4 + $0xcc8] sm:$0xff]
    %v498 = vld [vmem:[#allocation4 + $0xcd0] sm:$0xff]
    %v499 = vld [vmem:[#allocation4 + $0xcd8] sm:$0xff]
    %v500 = vld [vmem:[#allocation4 + $0xce0] sm:$0xff]
    %v501 = vld [vmem:[#allocation4 + $0xce8] sm:$0xff]
    %v502 = vld [vmem:[#allocation4 + $0xcf0] sm:$0xff]
    %v503 = vld [vmem:[#allocation4 + $0xcf8] sm:$0xff]
    %v504 = vld [vmem:[#allocation4 + $0xd00] sm:$0xff]
    %v505 = vld [vmem:[#allocation4 + $0xd08] sm:$0xff]
    %v506 = vld [vmem:[#allocation4 + $0xd10] sm:$0xff]
    %v507 = vld [vmem:[#allocation4 + $0xd18] sm:$0xff]
    %v508 = vld [vmem:[#allocation4 + $0xd20] sm:$0xff]
    %v509 = vld [vmem:[#allocation4 + $0xd28] sm:$0xff]
    %v510 = vld [vmem:[#allocation4 + $0xd30] sm:$0xff]
    %v511 = vld [vmem:[#allocation4 + $0xd38] sm:$0xff]
    %v512 = vld [vmem:[#allocation4 + $0xd40] sm:$0xff]
    %v513 = vld [vmem:[#allocation4 + $0xd48] sm:$0xff]
    %v514 = vld [vmem:[#allocation4 + $0xd50] sm:$0xff]
    %v515 = vld [vmem:[#allocation4 + $0xd58] sm:$0xff]
    %v516 = vld [vmem:[#allocation4 + $0xd60] sm:$0xff]
    %v517 = vld [vmem:[#allocation4 + $0xd68] sm:$0xff]
    %v518 = vld [vmem:[#allocation4 + $0xd70] sm:$0xff]
    %v519 = vld [vmem:[#allocation4 + $0xd78] sm:$0xff]
    %v520 = vld [vmem:[#allocation4 + $0xd80] sm:$0xff]
    %v521 = vld [vmem:[#allocation4 + $0xd88] sm:$0xff]
    %v522 = vld [vmem:[#allocation4 + $0xd90] sm:$0xff]
    %v523 = vld [vmem:[#allocation4 + $0xd98] sm:$0xff]
    %v524 = vld [vmem:[#allocation4 + $0xda0] sm:$0xff]
    %v525 = vld [vmem:[#allocation4 + $0xda8] sm:$0xff]
    %v526 = vld [vmem:[#allocation4 + $0xdb0] sm:$0xff]
    %v527 = vld [vmem:[#allocation4 + $0xdb8] sm:$0xff]
    %v528 = vld [vmem:[#allocation4 + $0xdc0] sm:$0xff]
    %v529 = vld [vmem:[#allocation4 + $0xdc8] sm:$0xff]
    %v530 = vld [vmem:[#allocation4 + $0xdd0] sm:$0xff]
    %v531 = vld [vmem:[#allocation4 + $0xdd8] sm:$0xff]
    %v532 = vld [vmem:[#allocation4 + $0xde0] sm:$0xff]
    %v533 = vld [vmem:[#allocation4 + $0xde8] sm:$0xff]
    %v534 = vld [vmem:[#allocation4 + $0xdf0] sm:$0xff]
    %v535 = vld [vmem:[#allocation4 + $0xdf8] sm:$0xff]
    %v536 = vld [vmem:[#allocation4 + $0xe00] sm:$0xff]
    %v537 = vld [vmem:[#allocation4 + $0xe08] sm:$0xff]
    %v538 = vld [vmem:[#allocation4 + $0xe10] sm:$0xff]
    %v539 = vld [vmem:[#allocation4 + $0xe18] sm:$0xff]
    %v540 = vld [vmem:[#allocation4 + $0xe20] sm:$0xff]
    %v541 = vld [vmem:[#allocation4 + $0xe28] sm:$0xff]
    %v542 = vld [vmem:[#allocation4 + $0xe30] sm:$0xff]
    %v543 = vld [vmem:[#allocation4 + $0xe38] sm:$0xff]
    %v544 = vld [vmem:[#allocation4 + $0xe40] sm:$0xff]
    %v545 = vld [vmem:[#allocation4 + $0xe48] sm:$0xff]
    %v546 = vld [vmem:[#allocation4 + $0xe50] sm:$0xff]
    %v547 = vld [vmem:[#allocation4 + $0xe58] sm:$0xff]
    %v548 = vld [vmem:[#allocation4 + $0xe60] sm:$0xff]
    %v549 = vld [vmem:[#allocation4 + $0xe68] sm:$0xff]
    %v550 = vld [vmem:[#allocation4 + $0xe70] sm:$0xff]
    %v551 = vld [vmem:[#allocation4 + $0xe78] sm:$0xff]
    %v552 = vld [vmem:[#allocation4 + $0xe80] sm:$0xff]
    %v553 = vld [vmem:[#allocation4 + $0xe88] sm:$0xff]
    %v554 = vld [vmem:[#allocation4 + $0xe90] sm:$0xff]
    %v555 = vld [vmem:[#allocation4 + $0xe98] sm:$0xff]
    %v556 = vld [vmem:[#allocation4 + $0xea0] sm:$0xff]
    %v557 = vld [vmem:[#allocation4 + $0xea8] sm:$0xff]
    %v558 = vld [vmem:[#allocation4 + $0xeb0] sm:$0xff]
    %v559 = vld [vmem:[#allocation4 + $0xeb8] sm:$0xff]
    %v560 = vld [vmem:[#allocation4 + $0xec0] sm:$0xff]
    %v561 = vld [vmem:[#allocation4 + $0xec8] sm:$0xff]
    %v562 = vld [vmem:[#allocation4 + $0xed0] sm:$0xff]
    %v563 = vld [vmem:[#allocation4 + $0xed8] sm:$0xff]
    %v564 = vld [vmem:[#allocation4 + $0xee0] sm:$0xff]
    %v565 = vld [vmem:[#allocation4 + $0xee8] sm:$0xff]
    %v566 = vld [vmem:[#allocation4 + $0xef0] sm:$0xff]
    %v567 = vld [vmem:[#allocation4 + $0xef8] sm:$0xff]
    %v568 = vld [vmem:[#allocation4 + $0xf00] sm:$0xff]
    %v569 = vld [vmem:[#allocation4 + $0xf08] sm:$0xff]
    %v570 = vld [vmem:[#allocation4 + $0xf10] sm:$0xff]
    %v571 = vld [vmem:[#allocation4 + $0xf18] sm:$0xff]
    %v572 = vld [vmem:[#allocation4 + $0xf20] sm:$0xff]
    %v573 = vld [vmem:[#allocation4 + $0xf28] sm:$0xff]
    %v574 = vld [vmem:[#allocation4 + $0xf30] sm:$0xff]
    %v575 = vld [vmem:[#allocation4 + $0xf38] sm:$0xff]
    %v576 = vld [vmem:[#allocation4 + $0xf40] sm:$0xff]
    %v577 = vld [vmem:[#allocation4 + $0xf48] sm:$0xff]
    %v578 = vld [vmem:[#allocation2] sm:$0x1f]
    %v580 = vperm.slane %v578, 0
    %v581 = vperm.slane %v578, 1
    %v582 = vperm.slane %v578, 2
    %v583 = vperm.slane %v578, 3
    %v584 = vperm.slane %v578, 4
    %vm590 = vcmask 130048
    %v592 = vsel %vm590, %v87, 0
    %594 = vmatpush.msra.mxu0 %v163
    %595 = vmatpush.msra.mxu0 %v158
    %596 = vmatpush.msra.mxu0 %v153
    %597 = vmatpush.msra.mxu0 %v148
    %598 = vmatpush.msra.mxu0 %v143
    %599 = vmatpush.msra.mxu0 %v138
    %600 = vmatpush.msra.mxu0 %v133
    %601 = vmatpush.msra.mxu0 %v128
    %602 = vmatpush.msra.mxu0 %v123
    %603 = vmatpush.msra.mxu0 %v118
    %604 = vmatpush.msra.mxu0 %v113
    %605 = vmatpush.msra.mxu0 %v108
    %606 = vmatpush.msra.mxu0 %v103
    %607 = vmatpush.msra.mxu0 %v98
    %608 = vmatpush.msra.mxu0 %v93
    %609 = vmatpush.msra.mxu0 %v88
    %610 = vmatmul.f32.gmra.mxu0 %v81
    %v611 = vpop.f32.mrf.mxu0
    %v612 = vadd.f32 %v580, %v611
    %613 = vdwg.mxu0
    %614 = vmatpush.msra.mxu0 %v243
    %615 = vmatpush.msra.mxu0 %v238
    %616 = vmatpush.msra.mxu0 %v233
    %617 = vmatpush.msra.mxu0 %v228
    %618 = vmatpush.msra.mxu0 %v223
    %619 = vmatpush.msra.mxu0 %v218
    %620 = vmatpush.msra.mxu0 %v213
    %621 = vmatpush.msra.mxu0 %v208
    %622 = vmatpush.msra.mxu0 %v203
    %623 = vmatpush.msra.mxu0 %v198
    %624 = vmatpush.msra.mxu0 %v193
    %625 = vmatpush.msra.mxu0 %v188
    %626 = vmatpush.msra.mxu0 %v183
    %627 = vmatpush.msra.mxu0 %v178
    %628 = vmatpush.msra.mxu0 %v173
    %629 = vmatpush.msra.mxu0 %v168
    %630 = vmatmul.f32.gmra.mxu0 %v82
    %v631 = vpop.f32.mrf.mxu0
    %v632 = vadd.f32 %v612, %v631
    %633 = vdwg.mxu0
    %634 = vmatpush.msra.mxu0 %v323
    %635 = vmatpush.msra.mxu0 %v318
    %636 = vmatpush.msra.mxu0 %v313
    %637 = vmatpush.msra.mxu0 %v308
    %638 = vmatpush.msra.mxu0 %v303
    %639 = vmatpush.msra.mxu0 %v298
    %640 = vmatpush.msra.mxu0 %v293
    %641 = vmatpush.msra.mxu0 %v288
    %642 = vmatpush.msra.mxu0 %v283
    %643 = vmatpush.msra.mxu0 %v278
    %644 = vmatpush.msra.mxu0 %v273
    %645 = vmatpush.msra.mxu0 %v268
    %646 = vmatpush.msra.mxu0 %v263
    %647 = vmatpush.msra.mxu0 %v258
    %648 = vmatpush.msra.mxu0 %v253
    %649 = vmatpush.msra.mxu0 %v248
    %650 = vmatmul.f32.gmra.mxu0 %v83
    %v651 = vpop.f32.mrf.mxu0
    %v652 = vadd.f32 %v632, %v651
    %653 = vdwg.mxu0
    %654 = vmatpush.msra.mxu0 %v403
    %655 = vmatpush.msra.mxu0 %v398
    %656 = vmatpush.msra.mxu0 %v393
    %657 = vmatpush.msra.mxu0 %v388
    %658 = vmatpush.msra.mxu0 %v383
    %659 = vmatpush.msra.mxu0 %v378
    %660 = vmatpush.msra.mxu0 %v373
    %661 = vmatpush.msra.mxu0 %v368
    %662 = vmatpush.msra.mxu0 %v363
    %663 = vmatpush.msra.mxu0 %v358
    %664 = vmatpush.msra.mxu0 %v353
    %665 = vmatpush.msra.mxu0 %v348
    %666 = vmatpush.msra.mxu0 %v343
    %667 = vmatpush.msra.mxu0 %v338
    %668 = vmatpush.msra.mxu0 %v333
    %669 = vmatpush.msra.mxu0 %v328
    %670 = vmatmul.f32.gmra.mxu0 %v84
    %v671 = vpop.f32.mrf.mxu0
    %v672 = vadd.f32 %v652, %v671
    %673 = vdwg.mxu0
    %674 = vmatpush.msra.mxu0 %v483
    %675 = vmatpush.msra.mxu0 %v478
    %676 = vmatpush.msra.mxu0 %v473
    %677 = vmatpush.msra.mxu0 %v468
    %678 = vmatpush.msra.mxu0 %v463
    %679 = vmatpush.msra.mxu0 %v458
    %680 = vmatpush.msra.mxu0 %v453
    %681 = vmatpush.msra.mxu0 %v448
    %682 = vmatpush.msra.mxu0 %v443
    %683 = vmatpush.msra.mxu0 %v438
    %684 = vmatpush.msra.mxu0 %v433
    %685 = vmatpush.msra.mxu0 %v428
    %686 = vmatpush.msra.mxu0 %v423
    %687 = vmatpush.msra.mxu0 %v418
    %688 = vmatpush.msra.mxu0 %v413
    %689 = vmatpush.msra.mxu0 %v408
    %690 = vmatmul.f32.gmra.mxu0 %v85
    %v691 = vpop.f32.mrf.mxu0
    %v692 = vadd.f32 %v672, %v691
    %693 = vdwg.mxu0
    %694 = vmatpush.msra.mxu0 %v563
    %695 = vmatpush.msra.mxu0 %v558
    %696 = vmatpush.msra.mxu0 %v553
    %697 = vmatpush.msra.mxu0 %v548
    %698 = vmatpush.msra.mxu0 %v543
    %699 = vmatpush.msra.mxu0 %v538
    %700 = vmatpush.msra.mxu0 %v533
    %701 = vmatpush.msra.mxu0 %v528
    %702 = vmatpush.msra.mxu0 %v523
    %703 = vmatpush.msra.mxu0 %v518
    %704 = vmatpush.msra.mxu0 %v513
    %705 = vmatpush.msra.mxu0 %v508
    %706 = vmatpush.msra.mxu0 %v503
    %707 = vmatpush.msra.mxu0 %v498
    %708 = vmatpush.msra.mxu0 %v493
    %709 = vmatpush.msra.mxu0 %v488
    %710 = vmatmul.f32.gmra.mxu0 %v86
    %v711 = vpop.f32.mrf.mxu0
    %v712 = vadd.f32 %v692, %v711
    %713 = vdwg.mxu0
    %714 = vmatpush.msra.mxu0 0.0
    %715 = vmatpush.msra.mxu0 0.0
    %716 = vmatpush.msra.mxu0 0.0
    %717 = vmatpush.msra.mxu0 0.0
    %718 = vmatpush.msra.mxu0 0.0
    %719 = vmatpush.msra.mxu0 0.0
    %720 = vmatpush.msra.mxu0 0.0
    %721 = vmatpush.msra.mxu0 0.0
    %722 = vmatpush.msra.mxu0 0.0
    %723 = vmatpush.msra.mxu0 0.0
    %724 = vmatpush.msra.mxu0 0.0
    %725 = vmatpush.msra.mxu0 0.0
    %726 = vmatpush.msra.mxu0 0.0
    %727 = vmatpush.msra.mxu0 0.0
    %728 = vmatpush.msra.mxu0 %v573
    %729 = vmatpush.msra.mxu0 %v568
    %730 = vmatmul.f32.gmra.mxu0 %v592
    %v731 = vpop.f32.mrf.mxu0
    %v732 = vadd.f32 %v712, %v731
    %733 = vdwg.mxu0
    %734 = vmatpush.msra.mxu0 %v164
    %735 = vmatpush.msra.mxu0 %v159
    %736 = vmatpush.msra.mxu0 %v154
    %737 = vmatpush.msra.mxu0 %v149
    %738 = vmatpush.msra.mxu0 %v144
    %739 = vmatpush.msra.mxu0 %v139
    %740 = vmatpush.msra.mxu0 %v134
    %741 = vmatpush.msra.mxu0 %v129
    %742 = vmatpush.msra.mxu0 %v124
    %743 = vmatpush.msra.mxu0 %v119
    %744 = vmatpush.msra.mxu0 %v114
    %745 = vmatpush.msra.mxu0 %v109
    %746 = vmatpush.msra.mxu0 %v104
    %747 = vmatpush.msra.mxu0 %v99
    %748 = vmatpush.msra.mxu0 %v94
    %749 = vmatpush.msra.mxu0 %v89
    %750 = vmatmul.f32.gmra.mxu0 %v81
    %v751 = vpop.f32.mrf.mxu0
    %v752 = vadd.f32 %v581, %v751
    %753 = vdwg.mxu0
    %754 = vmatpush.msra.mxu0 %v244
    %755 = vmatpush.msra.mxu0 %v239
    %756 = vmatpush.msra.mxu0 %v234
    %757 = vmatpush.msra.mxu0 %v229
    %758 = vmatpush.msra.mxu0 %v224
    %759 = vmatpush.msra.mxu0 %v219
    %760 = vmatpush.msra.mxu0 %v214
    %761 = vmatpush.msra.mxu0 %v209
    %762 = vmatpush.msra.mxu0 %v204
    %763 = vmatpush.msra.mxu0 %v199
    %764 = vmatpush.msra.mxu0 %v194
    %765 = vmatpush.msra.mxu0 %v189
    %766 = vmatpush.msra.mxu0 %v184
    %767 = vmatpush.msra.mxu0 %v179
    %768 = vmatpush.msra.mxu0 %v174
    %769 = vmatpush.msra.mxu0 %v169
    %770 = vmatmul.f32.gmra.mxu0 %v82
    %v771 = vpop.f32.mrf.mxu0
    %v772 = vadd.f32 %v752, %v771
    %773 = vdwg.mxu0
    %774 = vmatpush.msra.mxu0 %v324
    %775 = vmatpush.msra.mxu0 %v319
    %776 = vmatpush.msra.mxu0 %v314
    %777 = vmatpush.msra.mxu0 %v309
    %778 = vmatpush.msra.mxu0 %v304
    %779 = vmatpush.msra.mxu0 %v299
    %780 = vmatpush.msra.mxu0 %v294
    %781 = vmatpush.msra.mxu0 %v289
    %782 = vmatpush.msra.mxu0 %v284
    %783 = vmatpush.msra.mxu0 %v279
    %784 = vmatpush.msra.mxu0 %v274
    %785 = vmatpush.msra.mxu0 %v269
    %786 = vmatpush.msra.mxu0 %v264
    %787 = vmatpush.msra.mxu0 %v259
    %788 = vmatpush.msra.mxu0 %v254
    %789 = vmatpush.msra.mxu0 %v249
    %790 = vmatmul.f32.gmra.mxu0 %v83
    %v791 = vpop.f32.mrf.mxu0
    %v792 = vadd.f32 %v772, %v791
    %793 = vdwg.mxu0
    %794 = vmatpush.msra.mxu0 %v404
    %795 = vmatpush.msra.mxu0 %v399
    %796 = vmatpush.msra.mxu0 %v394
    %797 = vmatpush.msra.mxu0 %v389
    %798 = vmatpush.msra.mxu0 %v384
    %799 = vmatpush.msra.mxu0 %v379
    %800 = vmatpush.msra.mxu0 %v374
    %801 = vmatpush.msra.mxu0 %v369
    %802 = vmatpush.msra.mxu0 %v364
    %803 = vmatpush.msra.mxu0 %v359
    %804 = vmatpush.msra.mxu0 %v354
    %805 = vmatpush.msra.mxu0 %v349
    %806 = vmatpush.msra.mxu0 %v344
    %807 = vmatpush.msra.mxu0 %v339
    %808 = vmatpush.msra.mxu0 %v334
    %809 = vmatpush.msra.mxu0 %v329
    %810 = vmatmul.f32.gmra.mxu0 %v84
    %v811 = vpop.f32.mrf.mxu0
    %v812 = vadd.f32 %v792, %v811
    %813 = vdwg.mxu0
    %814 = vmatpush.msra.mxu0 %v484
    %815 = vmatpush.msra.mxu0 %v479
    %816 = vmatpush.msra.mxu0 %v474
    %817 = vmatpush.msra.mxu0 %v469
    %818 = vmatpush.msra.mxu0 %v464
    %819 = vmatpush.msra.mxu0 %v459
    %820 = vmatpush.msra.mxu0 %v454
    %821 = vmatpush.msra.mxu0 %v449
    %822 = vmatpush.msra.mxu0 %v444
    %823 = vmatpush.msra.mxu0 %v439
    %824 = vmatpush.msra.mxu0 %v434
    %825 = vmatpush.msra.mxu0 %v429
    %826 = vmatpush.msra.mxu0 %v424
    %827 = vmatpush.msra.mxu0 %v419
    %828 = vmatpush.msra.mxu0 %v414
    %829 = vmatpush.msra.mxu0 %v409
    %830 = vmatmul.f32.gmra.mxu0 %v85
    %v831 = vpop.f32.mrf.mxu0
    %v832 = vadd.f32 %v812, %v831
    %833 = vdwg.mxu0
    %834 = vmatpush.msra.mxu0 %v564
    %835 = vmatpush.msra.mxu0 %v559
    %836 = vmatpush.msra.mxu0 %v554
    %837 = vmatpush.msra.mxu0 %v549
    %838 = vmatpush.msra.mxu0 %v544
    %839 = vmatpush.msra.mxu0 %v539
    %840 = vmatpush.msra.mxu0 %v534
    %841 = vmatpush.msra.mxu0 %v529
    %842 = vmatpush.msra.mxu0 %v524
    %843 = vmatpush.msra.mxu0 %v519
    %844 = vmatpush.msra.mxu0 %v514
    %845 = vmatpush.msra.mxu0 %v509
    %846 = vmatpush.msra.mxu0 %v504
    %847 = vmatpush.msra.mxu0 %v499
    %848 = vmatpush.msra.mxu0 %v494
    %849 = vmatpush.msra.mxu0 %v489
    %850 = vmatmul.f32.gmra.mxu0 %v86
    %v851 = vpop.f32.mrf.mxu0
    %v852 = vadd.f32 %v832, %v851
    %853 = vdwg.mxu0
    %854 = vmatpush.msra.mxu0 0.0
    %855 = vmatpush.msra.mxu0 0.0
    %856 = vmatpush.msra.mxu0 0.0
    %857 = vmatpush.msra.mxu0 0.0
    %858 = vmatpush.msra.mxu0 0.0
    %859 = vmatpush.msra.mxu0 0.0
    %860 = vmatpush.msra.mxu0 0.0
    %861 = vmatpush.msra.mxu0 0.0
    %862 = vmatpush.msra.mxu0 0.0
    %863 = vmatpush.msra.mxu0 0.0
    %864 = vmatpush.msra.mxu0 0.0
    %865 = vmatpush.msra.mxu0 0.0
    %866 = vmatpush.msra.mxu0 0.0
    %867 = vmatpush.msra.mxu0 0.0
    %868 = vmatpush.msra.mxu0 %v574
    %869 = vmatpush.msra.mxu0 %v569
    %870 = vmatmul.f32.gmra.mxu0 %v592
    %v871 = vpop.f32.mrf.mxu0
    %v872 = vadd.f32 %v852, %v871
    %873 = vdwg.mxu0
    %874 = vmatpush.msra.mxu0 %v165
    %875 = vmatpush.msra.mxu0 %v160
    %876 = vmatpush.msra.mxu0 %v155
    %877 = vmatpush.msra.mxu0 %v150
    %878 = vmatpush.msra.mxu0 %v145
    %879 = vmatpush.msra.mxu0 %v140
    %880 = vmatpush.msra.mxu0 %v135
    %881 = vmatpush.msra.mxu0 %v130
    %882 = vmatpush.msra.mxu0 %v125
    %883 = vmatpush.msra.mxu0 %v120
    %884 = vmatpush.msra.mxu0 %v115
    %885 = vmatpush.msra.mxu0 %v110
    %886 = vmatpush.msra.mxu0 %v105
    %887 = vmatpush.msra.mxu0 %v100
    %888 = vmatpush.msra.mxu0 %v95
    %889 = vmatpush.msra.mxu0 %v90
    %890 = vmatmul.f32.gmra.mxu0 %v81
    %v891 = vpop.f32.mrf.mxu0
    %v892 = vadd.f32 %v582, %v891
    %893 = vdwg.mxu0
    %894 = vmatpush.msra.mxu0 %v245
    %895 = vmatpush.msra.mxu0 %v240
    %896 = vmatpush.msra.mxu0 %v235
    %897 = vmatpush.msra.mxu0 %v230
    %898 = vmatpush.msra.mxu0 %v225
    %899 = vmatpush.msra.mxu0 %v220
    %900 = vmatpush.msra.mxu0 %v215
    %901 = vmatpush.msra.mxu0 %v210
    %902 = vmatpush.msra.mxu0 %v205
    %903 = vmatpush.msra.mxu0 %v200
    %904 = vmatpush.msra.mxu0 %v195
    %905 = vmatpush.msra.mxu0 %v190
    %906 = vmatpush.msra.mxu0 %v185
    %907 = vmatpush.msra.mxu0 %v180
    %908 = vmatpush.msra.mxu0 %v175
    %909 = vmatpush.msra.mxu0 %v170
    %910 = vmatmul.f32.gmra.mxu0 %v82
    %v911 = vpop.f32.mrf.mxu0
    %v912 = vadd.f32 %v892, %v911
    %913 = vdwg.mxu0
    %914 = vmatpush.msra.mxu0 %v325
    %915 = vmatpush.msra.mxu0 %v320
    %916 = vmatpush.msra.mxu0 %v315
    %917 = vmatpush.msra.mxu0 %v310
    %918 = vmatpush.msra.mxu0 %v305
    %919 = vmatpush.msra.mxu0 %v300
    %920 = vmatpush.msra.mxu0 %v295
    %921 = vmatpush.msra.mxu0 %v290
    %922 = vmatpush.msra.mxu0 %v285
    %923 = vmatpush.msra.mxu0 %v280
    %924 = vmatpush.msra.mxu0 %v275
    %925 = vmatpush.msra.mxu0 %v270
    %926 = vmatpush.msra.mxu0 %v265
    %927 = vmatpush.msra.mxu0 %v260
    %928 = vmatpush.msra.mxu0 %v255
    %929 = vmatpush.msra.mxu0 %v250
    %930 = vmatmul.f32.gmra.mxu0 %v83
    %v931 = vpop.f32.mrf.mxu0
    %v932 = vadd.f32 %v912, %v931
    %933 = vdwg.mxu0
    %934 = vmatpush.msra.mxu0 %v405
    %935 = vmatpush.msra.mxu0 %v400
    %936 = vmatpush.msra.mxu0 %v395
    %937 = vmatpush.msra.mxu0 %v390
    %938 = vmatpush.msra.mxu0 %v385
    %939 = vmatpush.msra.mxu0 %v380
    %940 = vmatpush.msra.mxu0 %v375
    %941 = vmatpush.msra.mxu0 %v370
    %942 = vmatpush.msra.mxu0 %v365
    %943 = vmatpush.msra.mxu0 %v360
    %944 = vmatpush.msra.mxu0 %v355
    %945 = vmatpush.msra.mxu0 %v350
    %946 = vmatpush.msra.mxu0 %v345
    %947 = vmatpush.msra.mxu0 %v340
    %948 = vmatpush.msra.mxu0 %v335
    %949 = vmatpush.msra.mxu0 %v330
    %950 = vmatmul.f32.gmra.mxu0 %v84
    %v951 = vpop.f32.mrf.mxu0
    %v952 = vadd.f32 %v932, %v951
    %953 = vdwg.mxu0
    %954 = vmatpush.msra.mxu0 %v485
    %955 = vmatpush.msra.mxu0 %v480
    %956 = vmatpush.msra.mxu0 %v475
    %957 = vmatpush.msra.mxu0 %v470
    %958 = vmatpush.msra.mxu0 %v465
    %959 = vmatpush.msra.mxu0 %v460
    %960 = vmatpush.msra.mxu0 %v455
    %961 = vmatpush.msra.mxu0 %v450
    %962 = vmatpush.msra.mxu0 %v445
    %963 = vmatpush.msra.mxu0 %v440
    %964 = vmatpush.msra.mxu0 %v435
    %965 = vmatpush.msra.mxu0 %v430
    %966 = vmatpush.msra.mxu0 %v425
    %967 = vmatpush.msra.mxu0 %v420
    %968 = vmatpush.msra.mxu0 %v415
    %969 = vmatpush.msra.mxu0 %v410
    %970 = vmatmul.f32.gmra.mxu0 %v85
    %v971 = vpop.f32.mrf.mxu0
    %v972 = vadd.f32 %v952, %v971
    %973 = vdwg.mxu0
    %974 = vmatpush.msra.mxu0 %v565
    %975 = vmatpush.msra.mxu0 %v560
    %976 = vmatpush.msra.mxu0 %v555
    %977 = vmatpush.msra.mxu0 %v550
    %978 = vmatpush.msra.mxu0 %v545
    %979 = vmatpush.msra.mxu0 %v540
    %980 = vmatpush.msra.mxu0 %v535
    %981 = vmatpush.msra.mxu0 %v530
    %982 = vmatpush.msra.mxu0 %v525
    %983 = vmatpush.msra.mxu0 %v520
    %984 = vmatpush.msra.mxu0 %v515
    %985 = vmatpush.msra.mxu0 %v510
    %986 = vmatpush.msra.mxu0 %v505
    %987 = vmatpush.msra.mxu0 %v500
    %988 = vmatpush.msra.mxu0 %v495
    %989 = vmatpush.msra.mxu0 %v490
    %990 = vmatmul.f32.gmra.mxu0 %v86
    %v991 = vpop.f32.mrf.mxu0
    %v992 = vadd.f32 %v972, %v991
    %993 = vdwg.mxu0
    %994 = vmatpush.msra.mxu0 0.0
    %995 = vmatpush.msra.mxu0 0.0
    %996 = vmatpush.msra.mxu0 0.0
    %997 = vmatpush.msra.mxu0 0.0
    %998 = vmatpush.msra.mxu0 0.0
    %999 = vmatpush.msra.mxu0 0.0
    %1000 = vmatpush.msra.mxu0 0.0
    %1001 = vmatpush.msra.mxu0 0.0
    %1002 = vmatpush.msra.mxu0 0.0
    %1003 = vmatpush.msra.mxu0 0.0
    %1004 = vmatpush.msra.mxu0 0.0
    %1005 = vmatpush.msra.mxu0 0.0
    %1006 = vmatpush.msra.mxu0 0.0
    %1007 = vmatpush.msra.mxu0 0.0
    %1008 = vmatpush.msra.mxu0 %v575
    %1009 = vmatpush.msra.mxu0 %v570
    %1010 = vmatmul.f32.gmra.mxu0 %v592
    %v1011 = vpop.f32.mrf.mxu0
    %v1012 = vadd.f32 %v992, %v1011
    %1013 = vdwg.mxu0
    %1014 = vmatpush.msra.mxu0 %v166
    %1015 = vmatpush.msra.mxu0 %v161
    %1016 = vmatpush.msra.mxu0 %v156
    %1017 = vmatpush.msra.mxu0 %v151
    %1018 = vmatpush.msra.mxu0 %v146
    %1019 = vmatpush.msra.mxu0 %v141
    %1020 = vmatpush.msra.mxu0 %v136
    %1021 = vmatpush.msra.mxu0 %v131
    %1022 = vmatpush.msra.mxu0 %v126
    %1023 = vmatpush.msra.mxu0 %v121
    %1024 = vmatpush.msra.mxu0 %v116
    %1025 = vmatpush.msra.mxu0 %v111
    %1026 = vmatpush.msra.mxu0 %v106
    %1027 = vmatpush.msra.mxu0 %v101
    %1028 = vmatpush.msra.mxu0 %v96
    %1029 = vmatpush.msra.mxu0 %v91
    %1030 = vmatmul.f32.gmra.mxu0 %v81
    %v1031 = vpop.f32.mrf.mxu0
    %v1032 = vadd.f32 %v583, %v1031
    %1033 = vdwg.mxu0
    %1034 = vmatpush.msra.mxu0 %v246
    %1035 = vmatpush.msra.mxu0 %v241
    %1036 = vmatpush.msra.mxu0 %v236
    %1037 = vmatpush.msra.mxu0 %v231
    %1038 = vmatpush.msra.mxu0 %v226
    %1039 = vmatpush.msra.mxu0 %v221
    %1040 = vmatpush.msra.mxu0 %v216
    %1041 = vmatpush.msra.mxu0 %v211
    %1042 = vmatpush.msra.mxu0 %v206
    %1043 = vmatpush.msra.mxu0 %v201
    %1044 = vmatpush.msra.mxu0 %v196
    %1045 = vmatpush.msra.mxu0 %v191
    %1046 = vmatpush.msra.mxu0 %v186
    %1047 = vmatpush.msra.mxu0 %v181
    %1048 = vmatpush.msra.mxu0 %v176
    %1049 = vmatpush.msra.mxu0 %v171
    %1050 = vmatmul.f32.gmra.mxu0 %v82
    %v1051 = vpop.f32.mrf.mxu0
    %v1052 = vadd.f32 %v1032, %v1051
    %1053 = vdwg.mxu0
    %1054 = vmatpush.msra.mxu0 %v326
    %1055 = vmatpush.msra.mxu0 %v321
    %1056 = vmatpush.msra.mxu0 %v316
    %1057 = vmatpush.msra.mxu0 %v311
    %1058 = vmatpush.msra.mxu0 %v306
    %1059 = vmatpush.msra.mxu0 %v301
    %1060 = vmatpush.msra.mxu0 %v296
    %1061 = vmatpush.msra.mxu0 %v291
    %1062 = vmatpush.msra.mxu0 %v286
    %1063 = vmatpush.msra.mxu0 %v281
    %1064 = vmatpush.msra.mxu0 %v276
    %1065 = vmatpush.msra.mxu0 %v271
    %1066 = vmatpush.msra.mxu0 %v266
    %1067 = vmatpush.msra.mxu0 %v261
    %1068 = vmatpush.msra.mxu0 %v256
    %1069 = vmatpush.msra.mxu0 %v251
    %1070 = vmatmul.f32.gmra.mxu0 %v83
    %v1071 = vpop.f32.mrf.mxu0
    %v1072 = vadd.f32 %v1052, %v1071
    %1073 = vdwg.mxu0
    %1074 = vmatpush.msra.mxu0 %v406
    %1075 = vmatpush.msra.mxu0 %v401
    %1076 = vmatpush.msra.mxu0 %v396
    %1077 = vmatpush.msra.mxu0 %v391
    %1078 = vmatpush.msra.mxu0 %v386
    %1079 = vmatpush.msra.mxu0 %v381
    %1080 = vmatpush.msra.mxu0 %v376
    %1081 = vmatpush.msra.mxu0 %v371
    %1082 = vmatpush.msra.mxu0 %v366
    %1083 = vmatpush.msra.mxu0 %v361
    %1084 = vmatpush.msra.mxu0 %v356
    %1085 = vmatpush.msra.mxu0 %v351
    %1086 = vmatpush.msra.mxu0 %v346
    %1087 = vmatpush.msra.mxu0 %v341
    %1088 = vmatpush.msra.mxu0 %v336
    %1089 = vmatpush.msra.mxu0 %v331
    %1090 = vmatmul.f32.gmra.mxu0 %v84
    %v1091 = vpop.f32.mrf.mxu0
    %v1092 = vadd.f32 %v1072, %v1091
    %1093 = vdwg.mxu0
    %1094 = vmatpush.msra.mxu0 %v486
    %1095 = vmatpush.msra.mxu0 %v481
    %1096 = vmatpush.msra.mxu0 %v476
    %1097 = vmatpush.msra.mxu0 %v471
    %1098 = vmatpush.msra.mxu0 %v466
    %1099 = vmatpush.msra.mxu0 %v461
    %1100 = vmatpush.msra.mxu0 %v456
    %1101 = vmatpush.msra.mxu0 %v451
    %1102 = vmatpush.msra.mxu0 %v446
    %1103 = vmatpush.msra.mxu0 %v441
    %1104 = vmatpush.msra.mxu0 %v436
    %1105 = vmatpush.msra.mxu0 %v431
    %1106 = vmatpush.msra.mxu0 %v426
    %1107 = vmatpush.msra.mxu0 %v421
    %1108 = vmatpush.msra.mxu0 %v416
    %1109 = vmatpush.msra.mxu0 %v411
    %1110 = vmatmul.f32.gmra.mxu0 %v85
    %v1111 = vpop.f32.mrf.mxu0
    %v1112 = vadd.f32 %v1092, %v1111
    %1113 = vdwg.mxu0
    %1114 = vmatpush.msra.mxu0 %v566
    %1115 = vmatpush.msra.mxu0 %v561
    %1116 = vmatpush.msra.mxu0 %v556
    %1117 = vmatpush.msra.mxu0 %v551
    %1118 = vmatpush.msra.mxu0 %v546
    %1119 = vmatpush.msra.mxu0 %v541
    %1120 = vmatpush.msra.mxu0 %v536
    %1121 = vmatpush.msra.mxu0 %v531
    %1122 = vmatpush.msra.mxu0 %v526
    %1123 = vmatpush.msra.mxu0 %v521
    %1124 = vmatpush.msra.mxu0 %v516
    %1125 = vmatpush.msra.mxu0 %v511
    %1126 = vmatpush.msra.mxu0 %v506
    %1127 = vmatpush.msra.mxu0 %v501
    %1128 = vmatpush.msra.mxu0 %v496
    %1129 = vmatpush.msra.mxu0 %v491
    %1130 = vmatmul.f32.gmra.mxu0 %v86
    %v1131 = vpop.f32.mrf.mxu0
    %v1132 = vadd.f32 %v1112, %v1131
    %1133 = vdwg.mxu0
    %1134 = vmatpush.msra.mxu0 0.0
    %1135 = vmatpush.msra.mxu0 0.0
    %1136 = vmatpush.msra.mxu0 0.0
    %1137 = vmatpush.msra.mxu0 0.0
    %1138 = vmatpush.msra.mxu0 0.0
    %1139 = vmatpush.msra.mxu0 0.0
    %1140 = vmatpush.msra.mxu0 0.0
    %1141 = vmatpush.msra.mxu0 0.0
    %1142 = vmatpush.msra.mxu0 0.0
    %1143 = vmatpush.msra.mxu0 0.0
    %1144 = vmatpush.msra.mxu0 0.0
    %1145 = vmatpush.msra.mxu0 0.0
    %1146 = vmatpush.msra.mxu0 0.0
    %1147 = vmatpush.msra.mxu0 0.0
    %1148 = vmatpush.msra.mxu0 %v576
    %1149 = vmatpush.msra.mxu0 %v571
    %1150 = vmatmul.f32.gmra.mxu0 %v592
    %v1151 = vpop.f32.mrf.mxu0
    %v1152 = vadd.f32 %v1132, %v1151
    %1153 = vdwg.mxu0
    %1154 = vmatpush.msra.mxu0 %v167
    %1155 = vmatpush.msra.mxu0 %v162
    %1156 = vmatpush.msra.mxu0 %v157
    %1157 = vmatpush.msra.mxu0 %v152
    %1158 = vmatpush.msra.mxu0 %v147
    %1159 = vmatpush.msra.mxu0 %v142
    %1160 = vmatpush.msra.mxu0 %v137
    %1161 = vmatpush.msra.mxu0 %v132
    %1162 = vmatpush.msra.mxu0 %v127
    %1163 = vmatpush.msra.mxu0 %v122
    %1164 = vmatpush.msra.mxu0 %v117
    %1165 = vmatpush.msra.mxu0 %v112
    %1166 = vmatpush.msra.mxu0 %v107
    %1167 = vmatpush.msra.mxu0 %v102
    %1168 = vmatpush.msra.mxu0 %v97
    %1169 = vmatpush.msra.mxu0 %v92
    %1170 = vmatmul.f32.gmra.mxu0 %v81
    %v1171 = vpop.f32.mrf.mxu0
    %v1172 = vadd.f32 %v584, %v1171
    %1173 = vdwg.mxu0
    %1174 = vmatpush.msra.mxu0 %v247
    %1175 = vmatpush.msra.mxu0 %v242
    %1176 = vmatpush.msra.mxu0 %v237
    %1177 = vmatpush.msra.mxu0 %v232
    %1178 = vmatpush.msra.mxu0 %v227
    %1179 = vmatpush.msra.mxu0 %v222
    %1180 = vmatpush.msra.mxu0 %v217
    %1181 = vmatpush.msra.mxu0 %v212
    %1182 = vmatpush.msra.mxu0 %v207
    %1183 = vmatpush.msra.mxu0 %v202
    %1184 = vmatpush.msra.mxu0 %v197
    %1185 = vmatpush.msra.mxu0 %v192
    %1186 = vmatpush.msra.mxu0 %v187
    %1187 = vmatpush.msra.mxu0 %v182
    %1188 = vmatpush.msra.mxu0 %v177
    %1189 = vmatpush.msra.mxu0 %v172
    %1190 = vmatmul.f32.gmra.mxu0 %v82
    %v1191 = vpop.f32.mrf.mxu0
    %v1192 = vadd.f32 %v1172, %v1191
    %1193 = vdwg.mxu0
    %1194 = vmatpush.msra.mxu0 %v327
    %1195 = vmatpush.msra.mxu0 %v322
    %1196 = vmatpush.msra.mxu0 %v317
    %1197 = vmatpush.msra.mxu0 %v312
    %1198 = vmatpush.msra.mxu0 %v307
    %1199 = vmatpush.msra.mxu0 %v302
    %1200 = vmatpush.msra.mxu0 %v297
    %1201 = vmatpush.msra.mxu0 %v292
    %1202 = vmatpush.msra.mxu0 %v287
    %1203 = vmatpush.msra.mxu0 %v282
    %1204 = vmatpush.msra.mxu0 %v277
    %1205 = vmatpush.msra.mxu0 %v272
    %1206 = vmatpush.msra.mxu0 %v267
    %1207 = vmatpush.msra.mxu0 %v262
    %1208 = vmatpush.msra.mxu0 %v257
    %1209 = vmatpush.msra.mxu0 %v252
    %1210 = vmatmul.f32.gmra.mxu0 %v83
    %v1211 = vpop.f32.mrf.mxu0
    %v1212 = vadd.f32 %v1192, %v1211
    %1213 = vdwg.mxu0
    %1214 = vmatpush.msra.mxu0 %v407
    %1215 = vmatpush.msra.mxu0 %v402
    %1216 = vmatpush.msra.mxu0 %v397
    %1217 = vmatpush.msra.mxu0 %v392
    %1218 = vmatpush.msra.mxu0 %v387
    %1219 = vmatpush.msra.mxu0 %v382
    %1220 = vmatpush.msra.mxu0 %v377
    %1221 = vmatpush.msra.mxu0 %v372
    %1222 = vmatpush.msra.mxu0 %v367
    %1223 = vmatpush.msra.mxu0 %v362
    %1224 = vmatpush.msra.mxu0 %v357
    %1225 = vmatpush.msra.mxu0 %v352
    %1226 = vmatpush.msra.mxu0 %v347
    %1227 = vmatpush.msra.mxu0 %v342
    %1228 = vmatpush.msra.mxu0 %v337
    %1229 = vmatpush.msra.mxu0 %v332
    %1230 = vmatmul.f32.gmra.mxu0 %v84
    %v1231 = vpop.f32.mrf.mxu0
    %v1232 = vadd.f32 %v1212, %v1231
    %1233 = vdwg.mxu0
    %1234 = vmatpush.msra.mxu0 %v487
    %1235 = vmatpush.msra.mxu0 %v482
    %1236 = vmatpush.msra.mxu0 %v477
    %1237 = vmatpush.msra.mxu0 %v472
    %1238 = vmatpush.msra.mxu0 %v467
    %1239 = vmatpush.msra.mxu0 %v462
    %1240 = vmatpush.msra.mxu0 %v457
    %1241 = vmatpush.msra.mxu0 %v452
    %1242 = vmatpush.msra.mxu0 %v447
    %1243 = vmatpush.msra.mxu0 %v442
    %1244 = vmatpush.msra.mxu0 %v437
    %1245 = vmatpush.msra.mxu0 %v432
    %1246 = vmatpush.msra.mxu0 %v427
    %1247 = vmatpush.msra.mxu0 %v422
    %1248 = vmatpush.msra.mxu0 %v417
    %1249 = vmatpush.msra.mxu0 %v412
    %1250 = vmatmul.f32.gmra.mxu0 %v85
    %v1251 = vpop.f32.mrf.mxu0
    %v1252 = vadd.f32 %v1232, %v1251
    %1253 = vdwg.mxu0
    %1254 = vmatpush.msra.mxu0 %v567
    %1255 = vmatpush.msra.mxu0 %v562
    %1256 = vmatpush.msra.mxu0 %v557
    %1257 = vmatpush.msra.mxu0 %v552
    %1258 = vmatpush.msra.mxu0 %v547
    %1259 = vmatpush.msra.mxu0 %v542
    %1260 = vmatpush.msra.mxu0 %v537
    %1261 = vmatpush.msra.mxu0 %v532
    %1262 = vmatpush.msra.mxu0 %v527
    %1263 = vmatpush.msra.mxu0 %v522
    %1264 = vmatpush.msra.mxu0 %v517
    %1265 = vmatpush.msra.mxu0 %v512
    %1266 = vmatpush.msra.mxu0 %v507
    %1267 = vmatpush.msra.mxu0 %v502
    %1268 = vmatpush.msra.mxu0 %v497
    %1269 = vmatpush.msra.mxu0 %v492
    %1270 = vmatmul.f32.gmra.mxu0 %v86
    %v1271 = vpop.f32.mrf.mxu0
    %v1272 = vadd.f32 %v1252, %v1271
    %1273 = vdwg.mxu0
    %1274 = vmatpush.msra.mxu0 0.0
    %1275 = vmatpush.msra.mxu0 0.0
    %1276 = vmatpush.msra.mxu0 0.0
    %1277 = vmatpush.msra.mxu0 0.0
    %1278 = vmatpush.msra.mxu0 0.0
    %1279 = vmatpush.msra.mxu0 0.0
    %1280 = vmatpush.msra.mxu0 0.0
    %1281 = vmatpush.msra.mxu0 0.0
    %1282 = vmatpush.msra.mxu0 0.0
    %1283 = vmatpush.msra.mxu0 0.0
    %1284 = vmatpush.msra.mxu0 0.0
    %1285 = vmatpush.msra.mxu0 0.0
    %1286 = vmatpush.msra.mxu0 0.0
    %1287 = vmatpush.msra.mxu0 0.0
    %1288 = vmatpush.msra.mxu0 %v577
    %1289 = vmatpush.msra.mxu0 %v572
    %1290 = vmatmul.f32.gmra.mxu0 %v592
    %v1291 = vpop.f32.mrf.mxu0
    %v1292 = vadd.f32 %v1272, %v1291
    %1293 = vdwg.mxu0
    %v1294 = vmax.f32 %v732, 0.0
    %v1295 = vmax.f32 %v872, 0.0
    %v1296 = vmax.f32 %v1012, 0.0
    %v1297 = vmax.f32 %v1152, 0.0
    %v1298 = vmax.f32 %v1292, 0.0
    %v1299 = vld [vmem:[#allocation6] sm:$0xff]
    %v1300 = vld [vmem:[#allocation6 + $0x8] sm:$0xff]
    %v1301 = vld [vmem:[#allocation6 + $0x10] sm:$0xff]
    %v1302 = vld [vmem:[#allocation6 + $0x18] sm:$0xff]
    %v1303 = vld [vmem:[#allocation6 + $0x20] sm:$0xff]
    %v1304 = vld [vmem:[#allocation6 + $0x28] sm:$0xff]
    %v1305 = vld [vmem:[#allocation6 + $0x30] sm:$0xff]
    %v1306 = vld [vmem:[#allocation6 + $0x38] sm:$0xff]
    %v1307 = vld [vmem:[#allocation6 + $0x40] sm:$0xff]
    %v1308 = vld [vmem:[#allocation6 + $0x48] sm:$0xff]
    %v1309 = vld [vmem:[#allocation6 + $0x50] sm:$0xff]
    %v1310 = vld [vmem:[#allocation6 + $0x58] sm:$0xff]
    %v1311 = vld [vmem:[#allocation6 + $0x60] sm:$0xff]
    %v1312 = vld [vmem:[#allocation6 + $0x68] sm:$0xff]
    %v1313 = vld [vmem:[#allocation6 + $0x70] sm:$0xff]
    %v1314 = vld [vmem:[#allocation6 + $0x78] sm:$0xff]
    %v1315 = vld [vmem:[#allocation6 + $0x80] sm:$0xff]
    %v1316 = vld [vmem:[#allocation6 + $0x88] sm:$0xff]
    %v1317 = vld [vmem:[#allocation6 + $0x90] sm:$0xff]
    %v1318 = vld [vmem:[#allocation6 + $0x98] sm:$0xff]
    %v1319 = vld [vmem:[#allocation6 + $0xa0] sm:$0xff]
    %v1320 = vld [vmem:[#allocation6 + $0xa8] sm:$0xff]
    %v1321 = vld [vmem:[#allocation6 + $0xb0] sm:$0xff]
    %v1322 = vld [vmem:[#allocation6 + $0xb8] sm:$0xff]
    %v1323 = vld [vmem:[#allocation6 + $0xc0] sm:$0xff]
    %v1324 = vld [vmem:[#allocation6 + $0xc8] sm:$0xff]
    %v1325 = vld [vmem:[#allocation6 + $0xd0] sm:$0xff]
    %v1326 = vld [vmem:[#allocation6 + $0xd8] sm:$0xff]
    %v1327 = vld [vmem:[#allocation6 + $0xe0] sm:$0xff]
    %v1328 = vld [vmem:[#allocation6 + $0xe8] sm:$0xff]
    %v1329 = vld [vmem:[#allocation6 + $0xf0] sm:$0xff]
    %v1330 = vld [vmem:[#allocation6 + $0xf8] sm:$0xff]
    %v1331 = vld [vmem:[#allocation6 + $0x100] sm:$0xff]
    %v1332 = vld [vmem:[#allocation6 + $0x108] sm:$0xff]
    %v1333 = vld [vmem:[#allocation6 + $0x110] sm:$0xff]
    %v1334 = vld [vmem:[#allocation6 + $0x118] sm:$0xff]
    %v1335 = vld [vmem:[#allocation6 + $0x120] sm:$0xff]
    %v1336 = vld [vmem:[#allocation6 + $0x128] sm:$0xff]
    %v1337 = vld [vmem:[#allocation6 + $0x130] sm:$0xff]
    %v1338 = vld [vmem:[#allocation6 + $0x138] sm:$0xff]
    %v1339 = vld [vmem:[#allocation6 + $0x140] sm:$0xff]
    %v1340 = vld [vmem:[#allocation6 + $0x148] sm:$0xff]
    %v1341 = vld [vmem:[#allocation6 + $0x150] sm:$0xff]
    %v1342 = vld [vmem:[#allocation6 + $0x158] sm:$0xff]
    %v1343 = vld [vmem:[#allocation6 + $0x160] sm:$0xff]
    %v1344 = vld [vmem:[#allocation6 + $0x168] sm:$0xff]
    %v1345 = vld [vmem:[#allocation6 + $0x170] sm:$0xff]
    %v1346 = vld [vmem:[#allocation6 + $0x178] sm:$0xff]
    %v1347 = vld [vmem:[#allocation6 + $0x180] sm:$0xff]
    %v1348 = vld [vmem:[#allocation6 + $0x188] sm:$0xff]
    %v1349 = vld [vmem:[#allocation6 + $0x190] sm:$0xff]
    %v1350 = vld [vmem:[#allocation6 + $0x198] sm:$0xff]
    %v1351 = vld [vmem:[#allocation6 + $0x1a0] sm:$0xff]
    %v1352 = vld [vmem:[#allocation6 + $0x1a8] sm:$0xff]
    %v1353 = vld [vmem:[#allocation6 + $0x1b0] sm:$0xff]
    %v1354 = vld [vmem:[#allocation6 + $0x1b8] sm:$0xff]
    %v1355 = vld [vmem:[#allocation6 + $0x1c0] sm:$0xff]
    %v1356 = vld [vmem:[#allocation6 + $0x1c8] sm:$0xff]
    %v1357 = vld [vmem:[#allocation6 + $0x1d0] sm:$0xff]
    %v1358 = vld [vmem:[#allocation6 + $0x1d8] sm:$0xff]
    %v1359 = vld [vmem:[#allocation6 + $0x1e0] sm:$0xff]
    %v1360 = vld [vmem:[#allocation6 + $0x1e8] sm:$0xff]
    %v1361 = vld [vmem:[#allocation6 + $0x1f0] sm:$0xff]
    %v1362 = vld [vmem:[#allocation6 + $0x1f8] sm:$0xff]
    %v1363 = vld [vmem:[#allocation6 + $0x200] sm:$0xff]
    %v1364 = vld [vmem:[#allocation6 + $0x208] sm:$0xff]
    %v1365 = vld [vmem:[#allocation6 + $0x210] sm:$0xff]
    %v1366 = vld [vmem:[#allocation6 + $0x218] sm:$0xff]
    %v1367 = vld [vmem:[#allocation6 + $0x220] sm:$0xff]
    %v1368 = vld [vmem:[#allocation6 + $0x228] sm:$0xff]
    %v1369 = vld [vmem:[#allocation6 + $0x230] sm:$0xff]
    %v1370 = vld [vmem:[#allocation6 + $0x238] sm:$0xff]
    %v1371 = vld [vmem:[#allocation6 + $0x240] sm:$0xff]
    %v1372 = vld [vmem:[#allocation6 + $0x248] sm:$0xff]
    %v1373 = vld [vmem:[#allocation6 + $0x250] sm:$0xff]
    %v1374 = vld [vmem:[#allocation6 + $0x258] sm:$0xff]
    %v1375 = vld [vmem:[#allocation6 + $0x260] sm:$0xff]
    %v1376 = vld [vmem:[#allocation6 + $0x268] sm:$0xff]
    %v1377 = vld [vmem:[#allocation6 + $0x270] sm:$0xff]
    %v1378 = vld [vmem:[#allocation6 + $0x278] sm:$0xff]
    %1379 = vmatpush.msra.mxu0 %v1314
    %1380 = vmatpush.msra.mxu0 %v1313
    %1381 = vmatpush.msra.mxu0 %v1312
    %1382 = vmatpush.msra.mxu0 %v1311
    %1383 = vmatpush.msra.mxu0 %v1310
    %1384 = vmatpush.msra.mxu0 %v1309
    %1385 = vmatpush.msra.mxu0 %v1308
    %1386 = vmatpush.msra.mxu0 %v1307
    %1387 = vmatpush.msra.mxu0 %v1306
    %1388 = vmatpush.msra.mxu0 %v1305
    %1389 = vmatpush.msra.mxu0 %v1304
    %1390 = vmatpush.msra.mxu0 %v1303
    %1391 = vmatpush.msra.mxu0 %v1302
    %1392 = vmatpush.msra.mxu0 %v1301
    %1393 = vmatpush.msra.mxu0 %v1300
    %1394 = vmatpush.msra.mxu0 %v1299
    %1395 = vmatmul.f32.gmra.mxu0 %v1294
    %v1396 = vpop.f32.mrf.mxu0
    %v1397 = vadd.f32 0.0, %v1396
    %1398 = vdwg.mxu0
    %1399 = vmatpush.msra.mxu0 %v1330
    %1400 = vmatpush.msra.mxu0 %v1329
    %1401 = vmatpush.msra.mxu0 %v1328
    %1402 = vmatpush.msra.mxu0 %v1327
    %1403 = vmatpush.msra.mxu0 %v1326
    %1404 = vmatpush.msra.mxu0 %v1325
    %1405 = vmatpush.msra.mxu0 %v1324
    %1406 = vmatpush.msra.mxu0 %v1323
    %1407 = vmatpush.msra.mxu0 %v1322
    %1408 = vmatpush.msra.mxu0 %v1321
    %1409 = vmatpush.msra.mxu0 %v1320
    %1410 = vmatpush.msra.mxu0 %v1319
    %1411 = vmatpush.msra.mxu0 %v1318
    %1412 = vmatpush.msra.mxu0 %v1317
    %1413 = vmatpush.msra.mxu0 %v1316
    %1414 = vmatpush.msra.mxu0 %v1315
    %1415 = vmatmul.f32.gmra.mxu0 %v1295
    %v1416 = vpop.f32.mrf.mxu0
    %v1417 = vadd.f32 %v1397, %v1416
    %1418 = vdwg.mxu0
    %1419 = vmatpush.msra.mxu0 %v1346
    %1420 = vmatpush.msra.mxu0 %v1345
    %1421 = vmatpush.msra.mxu0 %v1344
    %1422 = vmatpush.msra.mxu0 %v1343
    %1423 = vmatpush.msra.mxu0 %v1342
    %1424 = vmatpush.msra.mxu0 %v1341
    %1425 = vmatpush.msra.mxu0 %v1340
    %1426 = vmatpush.msra.mxu0 %v1339
    %1427 = vmatpush.msra.mxu0 %v1338
    %1428 = vmatpush.msra.mxu0 %v1337
    %1429 = vmatpush.msra.mxu0 %v1336
    %1430 = vmatpush.msra.mxu0 %v1335
    %1431 = vmatpush.msra.mxu0 %v1334
    %1432 = vmatpush.msra.mxu0 %v1333
    %1433 = vmatpush.msra.mxu0 %v1332
    %1434 = vmatpush.msra.mxu0 %v1331
    %1435 = vmatmul.f32.gmra.mxu0 %v1296
    %v1436 = vpop.f32.mrf.mxu0
    %v1437 = vadd.f32 %v1417, %v1436
    %1438 = vdwg.mxu0
    %1439 = vmatpush.msra.mxu0 %v1362
    %1440 = vmatpush.msra.mxu0 %v1361
    %1441 = vmatpush.msra.mxu0 %v1360
    %1442 = vmatpush.msra.mxu0 %v1359
    %1443 = vmatpush.msra.mxu0 %v1358
    %1444 = vmatpush.msra.mxu0 %v1357
    %1445 = vmatpush.msra.mxu0 %v1356
    %1446 = vmatpush.msra.mxu0 %v1355
    %1447 = vmatpush.msra.mxu0 %v1354
    %1448 = vmatpush.msra.mxu0 %v1353
    %1449 = vmatpush.msra.mxu0 %v1352
    %1450 = vmatpush.msra.mxu0 %v1351
    %1451 = vmatpush.msra.mxu0 %v1350
    %1452 = vmatpush.msra.mxu0 %v1349
    %1453 = vmatpush.msra.mxu0 %v1348
    %1454 = vmatpush.msra.mxu0 %v1347
    %1455 = vmatmul.f32.gmra.mxu0 %v1297
    %v1456 = vpop.f32.mrf.mxu0
    %v1457 = vadd.f32 %v1437, %v1456
    %1458 = vdwg.mxu0
    %1459 = vmatpush.msra.mxu0 %v1378
    %1460 = vmatpush.msra.mxu0 %v1377
    %1461 = vmatpush.msra.mxu0 %v1376
    %1462 = vmatpush.msra.mxu0 %v1375
    %1463 = vmatpush.msra.mxu0 %v1374
    %1464 = vmatpush.msra.mxu0 %v1373
    %1465 = vmatpush.msra.mxu0 %v1372
    %1466 = vmatpush.msra.mxu0 %v1371
    %1467 = vmatpush.msra.mxu0 %v1370
    %1468 = vmatpush.msra.mxu0 %v1369
    %1469 = vmatpush.msra.mxu0 %v1368
    %1470 = vmatpush.msra.mxu0 %v1367
    %1471 = vmatpush.msra.mxu0 %v1366
    %1472 = vmatpush.msra.mxu0 %v1365
    %1473 = vmatpush.msra.mxu0 %v1364
    %1474 = vmatpush.msra.mxu0 %v1363
    %1475 = vmatmul.f32.gmra.mxu0 %v1298
    %v1476 = vpop.f32.mrf.mxu0
    %v1477 = vadd.f32 %v1457, %v1476
    %1478 = vdwg.mxu0
    %v1479 = vmax.f32 %v1477, 0.0
    %v1480 = vld [vmem:[#allocation7] sm:$0xff]
    %v1481 = vld [vmem:[#allocation7 + $0x8] sm:$0xff]
    %v1482 = vld [vmem:[#allocation7 + $0x10] sm:$0xff]
    %v1483 = vld [vmem:[#allocation7 + $0x18] sm:$0xff]
    %v1484 = vld [vmem:[#allocation7 + $0x20] sm:$0xff]
    %v1485 = vld [vmem:[#allocation7 + $0x28] sm:$0xff]
    %v1486 = vld [vmem:[#allocation7 + $0x30] sm:$0xff]
    %v1487 = vld [vmem:[#allocation7 + $0x38] sm:$0xff]
    %v1488 = vld [vmem:[#allocation7 + $0x40] sm:$0xff]
    %v1489 = vld [vmem:[#allocation7 + $0x48] sm:$0xff]
    %v1490 = vld [vmem:[#allocation7 + $0x50] sm:$0xff]
    %v1491 = vld [vmem:[#allocation7 + $0x58] sm:$0xff]
    %v1492 = vld [vmem:[#allocation7 + $0x60] sm:$0xff]
    %v1493 = vld [vmem:[#allocation7 + $0x68] sm:$0xff]
    %v1494 = vld [vmem:[#allocation7 + $0x70] sm:$0xff]
    %v1495 = vld [vmem:[#allocation7 + $0x78] sm:$0xff]
    %1496 = vmatpush.msra.mxu0 %v1495
    %1497 = vmatpush.msra.mxu0 %v1494
    %1498 = vmatpush.msra.mxu0 %v1493
    %1499 = vmatpush.msra.mxu0 %v1492
    %1500 = vmatpush.msra.mxu0 %v1491
    %1501 = vmatpush.msra.mxu0 %v1490
    %1502 = vmatpush.msra.mxu0 %v1489
    %1503 = vmatpush.msra.mxu0 %v1488
    %1504 = vmatpush.msra.mxu0 %v1487
    %1505 = vmatpush.msra.mxu0 %v1486
    %1506 = vmatpush.msra.mxu0 %v1485
    %1507 = vmatpush.msra.mxu0 %v1484
    %1508 = vmatpush.msra.mxu0 %v1483
    %1509 = vmatpush.msra.mxu0 %v1482
    %1510 = vmatpush.msra.mxu0 %v1481
    %1511 = vmatpush.msra.mxu0 %v1480
    %1512 = vmatmul.f32.gmra.mxu0 %v1479
    %v1513 = vpop.f32.mrf.mxu0
    %v1514 = vadd.f32 0.0, %v1513
    %1515 = vdwg.mxu0
    %1516 = vst [vmem:[%s5] sm:$0xff] %v1514
    // Predicated region
    $region38: #{mnist_fc_in_forward.1} parent=1 // pred_check
      _
    $region39: #{mnist_fc_in_forward.1} parent=1 // pred_check_branch
      %1518 = sbr.rel (0) target = $region41
    $region40: #{mnist_fc_in_forward.1} parent=1 // pred_region
      _
    $region41: #{mnist_fc_in_forward.1} parent=1 // pred_fallthru
      _
    // Predicated region
    $region42: #{mnist_fc_in_forward.1} parent=1 // pred_check
      _
    $region43: #{mnist_fc_in_forward.1} parent=1 // pred_check_branch
      %1520 = sbr.rel (0) target = $region45
    $region44: #{mnist_fc_in_forward.1} parent=1 // pred_region
      _
    $region45: #{mnist_fc_in_forward.1} parent=1 // pred_fallthru
      _
    %1521 = vsyncpa [#allocation3], 1
    %1522 = vsyncpa [#allocation5], 1
    %1523 = vsyncpa [#allocation8], 1

</llo_original>
